<compile_context>
chip_gen: v5e
topology: v5e:2x2
jax: 0.10.0
libtpu: 0.0.40
codegen_flags: <defaults>
</compile_context>

<pallas_src>
import jax
import jax.numpy as jnp
from jax.experimental import pallas as pl
from jax.experimental.pallas import tpu as pltpu

LANE = 128


def _round_up(x, m):
    return ((x + m - 1) // m) * m


# -----------------------------------------------------------------------------
# Kernel
# -----------------------------------------------------------------------------
def network_kernel(x_ref, wb_ref, wh_ref, c_ref, o_ref):
    # f32 -> bf16 cast inside the kernel (VPU slack under the MXU); avoids a
    # materialized bf16 copy of x in HBM.
    xb = x_ref[...].astype(jnp.bfloat16)
    # Stand-in backbone linear: bf16 operands on the MXU, f32 accumulation.
    feat = jnp.dot(xb, wb_ref[...], preferred_element_type=jnp.float32)
    # Folded head (fc1 -> eval dropout -> fc2): N=1 matmul replaced by a lane
    # reduction (VPU/XLU); all biases pre-folded into one SMEM scalar.
    y = jnp.sum(feat * wh_ref[...], axis=-1, keepdims=True) + c_ref[0, 0]
    # Exact sigmoid epilogue in f32 (exp on EUP, exact divide).
    o_ref[...] = 1.0 / (1.0 + jnp.exp(-y))


# -----------------------------------------------------------------------------
# Offline parameter preprocessing (padding + exact algebraic folding)
# -----------------------------------------------------------------------------
def fold_params(params, backbone_out=1000):
    """Fold fc1∘drop(eval)∘fc2 + all biases; pad N to a lane multiple."""
    wb, bb, w1, b1, w2, b2 = params
    in_f = wb.shape[0]
    n_pad = _round_up(backbone_out, LANE)          # 1000 -> 1024

    # TODO(synk): Dropout(0.3) is identity in eval mode; the folds below are
    # exact for inference only.  Training-mode dropout would need
    # pltpu.prng_seed + pltpu.stateful_bernoulli and would prevent folding.
    wh_col = w1 @ w2                               # [1000, 1] folded head column
    c = bb @ wh_col + (b1 @ w2 + b2)               # [1, 1] all biases folded

    wh = jnp.zeros((1, n_pad), jnp.float32).at[0, :backbone_out].set(wh_col[:, 0])
    wb_p = jnp.zeros((in_f, n_pad), jnp.float32).at[:, :backbone_out].set(wb)

    return (wb_p.astype(jnp.bfloat16),             # MXU operand in bf16
            wh.astype(jnp.float32),                # [1, n_pad] head row
            c.astype(jnp.float32))                 # [1, 1] scalar bias (SMEM)


# -----------------------------------------------------------------------------
# Forward wrapper
# -----------------------------------------------------------------------------
@jax.jit
def network_forward(x_nchw, wb, wh, c):
    B = x_nchw.shape[0]
    in_f = x_nchw.size // B
    n_pad = wb.shape[1]

    # Free (bitcast) reshape; x stays f32 in HBM and is cast in-kernel.
    x_flat = x_nchw.reshape(B, in_f)

    # Batch tile: multiple of 16 (bf16 sublane packing), up to 512 rows, and
    # split so the grid has >= 2 steps for large B (v7x dual-TC occupancy).
    tm = max(16, min(512, _round_up(-(-B // 2), 16)))
    grid = (pl.cdiv(B, tm),)   # remainder rows handled by boundary masking

    out = pl.pallas_call(
        network_kernel,
        out_shape=jax.ShapeDtypeStruct((B, 1), jnp.float32),
        grid=grid,
        in_specs=[
            pl.BlockSpec((tm, in_f), lambda i: (i, 0)),        # x tile (pipelined)
            pl.BlockSpec((in_f, n_pad), lambda i: (0, 0)),     # resident bf16 weight
            pl.BlockSpec((1, n_pad), lambda i: (0, 0)),        # folded head row
            pl.BlockSpec(memory_space=pltpu.MemorySpace.SMEM),  # folded scalar bias
        ],
        out_specs=pl.BlockSpec((tm, 1), lambda i: (i, 0)),
        compiler_params=pltpu.CompilerParams(
            dimension_semantics=("parallel",),
            vmem_limit_bytes=32 * 1024 * 1024,
        ),
    )(x_flat, wb, wh, c)
    return out


# -----------------------------------------------------------------------------
# Parameter init (PyTorch-like uniform init) and pure-JAX reference
# -----------------------------------------------------------------------------
def init_params(key, in_features, backbone_out=1000, fc1=128, outdim=1):
    ks = jax.random.split(key, 6)
    sb = 1.0 / jnp.sqrt(in_features)
    s1 = 1.0 / jnp.sqrt(backbone_out)
    s2 = 1.0 / jnp.sqrt(fc1)
    wb = jax.random.uniform(ks[0], (in_features, backbone_out), jnp.float32, -sb, sb)
    bb = jax.random.uniform(ks[1], (1, backbone_out), jnp.float32, -sb, sb)
    w1 = jax.random.uniform(ks[2], (backbone_out, fc1), jnp.float32, -s1, s1)
    b1 = jax.random.uniform(ks[3], (1, fc1), jnp.float32, -s1, s1)
    w2 = jax.random.uniform(ks[4], (fc1, outdim), jnp.float32, -s2, s2)
    b2 = jax.random.uniform(ks[5], (1, outdim), jnp.float32, -s2, s2)
    return wb, bb, w1, b1, w2, b2


def reference_forward(x_nchw, params):
    wb, bb, w1, b1, w2, b2 = params
    B = x_nchw.shape[0]
    x_flat = x_nchw.reshape(B, -1).astype(jnp.float32)
    feat = x_flat @ wb + bb
    h = feat @ w1 + b1          # dropout eval-mode identity
    y = h @ w2 + b2
    return jax.nn.sigmoid(y)


if __name__ == "__main__":
    key = jax.random.PRNGKey(0)
    k_x, k_p = jax.random.split(key)

    # TODO(synk): the timm backbone is unspecified; a deterministic
    # flatten -> Linear(768, 1000) stand-in is used in its place.
    B, C, H, W = 2, 3, 16, 16  # small image input, NCHW (in_f = 768 = 6*128)
    x = jax.random.normal(k_x, (B, C, H, W), jnp.float32)

    params = init_params(k_p, in_features=C * H * W,
                         backbone_out=1000, fc1=128, outdim=1)
    wb_f, wh_f, c_f = fold_params(params, backbone_out=1000)

    out = network_forward(x, wb_f, wh_f, c_f)
    out = jax.block_until_ready(out)

    ref = reference_forward(x, params)

    assert out.shape == (B, 1)
    assert out.dtype == jnp.float32
    assert bool(jnp.all(jnp.isfinite(out)))
    # bf16 MXU operands vs. full-f32 reference (sigmoid epilogue is exact).
    assert bool(jnp.allclose(out, ref, atol=2e-2, rtol=0.0)), (out, ref)
    print("KERNEL_OK")
</pallas_src>

<mosaic_0001>
module attributes {stable_mosaic.version = 11 : i64} {
  func.func @network_kernel(%arg0: i32, %arg1: memref<16x768xf32, #tpu.memory_space<vmem>>, %arg2: memref<768x1024xbf16, #tpu.memory_space<vmem>>, %arg3: memref<1x1024xf32, #tpu.memory_space<vmem>>, %arg4: memref<1x1xf32, #tpu.memory_space<smem>>, %arg5: memref<16x1xf32, #tpu.memory_space<vmem>>) attributes {dimension_semantics = [#tpu.dimension_semantics<parallel>], iteration_bounds = array<i64: 1>, scalar_prefetch = 0 : i64, scratch_operands = 0 : i64, tpu.core_type = #tpu.core_type<tc>, window_params = [{transform_indices = @transform_0, window_bounds = array<i64: 16, 768>}, {pipeline_mode = #tpu.pipeline_mode<synchronous>, transform_indices = @transform_1, window_bounds = array<i64: 768, 1024>}, {pipeline_mode = #tpu.pipeline_mode<synchronous>, transform_indices = @transform_2, window_bounds = array<i64: 1, 1024>}, {transform_indices = @transform_3, window_bounds = array<i64: 1, 1>}, {transform_indices = @transform_4, window_bounds = array<i64: 16, 1>}]} {
    %c0 = arith.constant 0 : index
    %c0_0 = arith.constant 0 : index
    %0 = vector.load %arg1[%c0, %c0_0] : memref<16x768xf32, #tpu.memory_space<vmem>>, vector<16x768xf32>
    %1 = arith.truncf %0 : vector<16x768xf32> to vector<16x768xbf16>
    %c0_1 = arith.constant 0 : index
    %c0_2 = arith.constant 0 : index
    %2 = vector.load %arg2[%c0_1, %c0_2] : memref<768x1024xbf16, #tpu.memory_space<vmem>>, vector<768x1024xbf16>
    %cst = arith.constant dense<0.000000e+00> : vector<16x1024xf32>
    %3 = tpu.matmul %1, %2, %cst {dimension_numbers = #tpu.dot_dimension_numbers<[1], [0], [0], [1], [0, 0, 1, 1], [], []>} : vector<16x768xbf16>, vector<768x1024xbf16>, vector<16x1024xf32> -> vector<16x1024xf32>
    %c0_3 = arith.constant 0 : index
    %c0_4 = arith.constant 0 : index
    %4 = vector.load %arg3[%c0_3, %c0_4] : memref<1x1024xf32, #tpu.memory_space<vmem>>, vector<1x1024xf32>
    %5 = vector.broadcast %4 : vector<1x1024xf32> to vector<16x1024xf32>
    %6 = arith.mulf %3, %5 : vector<16x1024xf32>
    %cst_5 = arith.constant dense<0.000000e+00> : vector<16xf32>
    %7 = vector.multi_reduction <add>, %6, %cst_5 [1] : vector<16x1024xf32> to vector<16xf32>
    %8 = vector.shape_cast %7 : vector<16xf32> to vector<16x1xf32>
    %c0_6 = arith.constant 0 : index
    %c0_7 = arith.constant 0 : index
    %9 = memref.load %arg4[%c0_6, %c0_7] : memref<1x1xf32, #tpu.memory_space<smem>>
    %10 = vector.broadcast %9 : f32 to vector<16x1xf32>
    %11 = arith.addf %8, %10 : vector<16x1xf32>
    %cst_8 = arith.constant 0.000000e+00 : f32
    %12 = vector.broadcast %cst_8 : f32 to vector<16x1xf32>
    %13 = arith.subf %12, %11 : vector<16x1xf32>
    %14 = math.exp %13 : vector<16x1xf32>
    %cst_9 = arith.constant 1.000000e+00 : f32
    %15 = vector.broadcast %cst_9 : f32 to vector<16x1xf32>
    %16 = arith.addf %15, %14 : vector<16x1xf32>
    %cst_10 = arith.constant 1.000000e+00 : f32
    %17 = vector.broadcast %cst_10 : f32 to vector<16x1xf32>
    %18 = arith.divf %17, %16 : vector<16x1xf32>
    %c0_11 = arith.constant 0 : index
    %c0_12 = arith.constant 0 : index
    %19 = vector.load %arg5[%c0_11, %c0_12] : memref<16x1xf32, #tpu.memory_space<vmem>>, vector<16x1xf32>
    tpu.vector_store %arg5[%c0_11, %c0_12], %18 {strides = array<i32>} : memref<16x1xf32, #tpu.memory_space<vmem>>, vector<16x1xf32>,
    return
  }
  func.func @transform_0(%arg0: i32) -> (i32, i32) {
    %c0_i32 = arith.constant 0 : i32
    %c0_i32_0 = arith.constant 0 : i32
    return %arg0, %c0_i32 : i32, i32
  }
  func.func @transform_1(%arg0: i32) -> (i32, i32) {
    %c0_i32 = arith.constant 0 : i32
    %c0_i32_0 = arith.constant 0 : i32
    %c0_i32_1 = arith.constant 0 : i32
    return %c0_i32, %c0_i32_0 : i32, i32
  }
  func.func @transform_2(%arg0: i32) -> (i32, i32) {
    %c0_i32 = arith.constant 0 : i32
    %c0_i32_0 = arith.constant 0 : i32
    %c0_i32_1 = arith.constant 0 : i32
    return %c0_i32, %c0_i32_0 : i32, i32
  }
  func.func @transform_3(%arg0: i32) -> (i32, i32) {
    %c0_i32 = arith.constant 0 : i32
    %c0_i32_0 = arith.constant 0 : i32
    %c0_i32_1 = arith.constant 0 : i32
    return %c0_i32, %c0_i32_0 : i32, i32
  }
  func.func @transform_4(%arg0: i32) -> (i32, i32) {
    %c0_i32 = arith.constant 0 : i32
    %c0_i32_0 = arith.constant 0 : i32
    return %arg0, %c0_i32 : i32, i32
  }
}

</mosaic_0001>

<llo_original>
// kernel: network_forward.1
$region0: #{network_forward.1}
  #allocation0 [shape = 'u32[]', space=smem, size = 0x4, offset = 0x4, fixed_abs, tag = 'smem constant byte address 0x4 - core index']
  #allocation1 [shape = 'u32[72,128]{1,0:T(1,128)}', space=vmem, size = 0x9000, scoped, tag = 'internal scratch']
  #allocation2 [shape = 'f32[1,1]{1,0:T(1,128)S(6)}', space=smem, size = 0x200, scoped, tag = 'scoped memory for network_forward.1']
  %s0 = inlined_call_operand.vmem [shape: f32[2,768], index: 0, kind: input, shape index: {}]
  %s1 = inlined_call_operand.hbm [shape: bf16[768,1024], index: 1, kind: input, shape index: {}]
  %s2 = inlined_call_operand.hbm [shape: f32[1,1024], index: 2, kind: input, shape index: {}]
  %s3 = inlined_call_operand.<no memory space> [shape: f32[1,1], index: 3, kind: input, shape index: {}]
  %s4 = inlined_call_operand.vmem [shape: f32[2,1], index: 4, kind: output, shape index: {}]
  %s5 = sld [smem:[#allocation0]]
  $region64: #{network_forward.1} parent=0
    _
  %s7 = ssub.s32 1, %s5
  %s8 = scalar_select 0, %s7, %s5
  %9 = sst [smem:[#allocation2]] %s3
  $region1: #{network_forward.1} parent=0
    #allocation3 [shape = 'u8[1572864]{0}', space=vmem, size = 0x180000, scoped, tag = 'input window, operand 1, single buffered']
    #allocation4 [shape = 's32[1]{0}', space=sflag, size = 0x4, scoped, tag = 'scoped memory for network_forward.1']
    #allocation5 [shape = 'u8[4096]{0}', space=vmem, size = 0x1000, scoped, tag = 'input window, operand 2, single buffered']
    #allocation6 [shape = 's32[1]{0}', space=sflag, size = 0x4, scoped, tag = 'scoped memory for network_forward.1']
    #allocation7 [shape = 'u8[8192]{0}', space=vmem, size = 0x2000, scoped, tag = 'output window, operand 0, single buffered']
    %10 = vsyncpa [#allocation4], 0
    %11 = vsyncpa [#allocation6], 0
    // Predicated region
    $region2: #{network_forward.1} parent=1 // pred_check
      _
    $region3: #{network_forward.1} parent=1 // pred_check_branch
      %13 = sbr.rel (0) target = $region5
    $region4: #{network_forward.1} parent=1 // pred_region
      _
    $region5: #{network_forward.1} parent=1 // pred_fallthru
      _
    // Predicated region
    $region6: #{network_forward.1} parent=1 // pred_check
      _
    $region7: #{network_forward.1} parent=1 // pred_check_branch
      %15 = sbr.rel (0) target = $region9
    $region8: #{network_forward.1} parent=1 // pred_region
      %17 = vsyncadd [#allocation4], 0
      %s18 = sshll.u32 %s1, 4
      %s19 = int_to_ptr.hbm [resolvable:$true] %s18
      %s20 = sshll.u32 [#allocation3], 4
      %s21 = int_to_ptr.vmem [resolvable:$true] %s20
      %26 = dma.hbm_to_vmem [thread:$0]  %s19, 49152, %s21, [#allocation4], 512, 512, 32
    $region9: #{network_forward.1} parent=1 // pred_fallthru
      _
    // Predicated region
    $region10: #{network_forward.1} parent=1 // pred_check
      _
    $region11: #{network_forward.1} parent=1 // pred_check_branch
      %28 = sbr.rel (0) target = $region13
    $region12: #{network_forward.1} parent=1 // pred_region
      %30 = vsyncadd [#allocation6], 0
      %s32 = sshll.u32 %s2, 4
      %s33 = int_to_ptr.hbm [resolvable:$true] %s32
      %s34 = sshll.u32 [#allocation5], 4
      %s35 = int_to_ptr.vmem [resolvable:$true] %s34
      %37 = dma.hbm_to_vmem [thread:$0]  %s33, 128, %s35, [#allocation6]
    $region13: #{network_forward.1} parent=1 // pred_fallthru
      _
    // Predicated region
    $region14: #{network_forward.1} parent=1 // pred_check
      _
    $region15: #{network_forward.1} parent=1 // pred_check_branch
      %39 = sbr.rel (0) target = $region17
    $region16: #{network_forward.1} parent=1 // pred_region
      _
    $region17: #{network_forward.1} parent=1 // pred_fallthru
      _
    // Predicated region
    $region18: #{network_forward.1} parent=1 // pred_check
      _
    $region19: #{network_forward.1} parent=1 // pred_check_branch
      %41 = sbr.rel (0) target = $region21
    $region20: #{network_forward.1} parent=1 // pred_region
      %43 = dma.done [#allocation4], 49152
    $region21: #{network_forward.1} parent=1 // pred_fallthru
      _
    // Predicated region
    $region22: #{network_forward.1} parent=1 // pred_check
      _
    $region23: #{network_forward.1} parent=1 // pred_check_branch
      %45 = sbr.rel (0) target = $region25
    $region24: #{network_forward.1} parent=1 // pred_region
      %47 = dma.done [#allocation6], 128
    $region25: #{network_forward.1} parent=1 // pred_fallthru
      _
    %v48 = vld [vmem:[%s0] sm:$0xff]
    %v49 = vld [vmem:[%s0 + $0x8] sm:$0xf]
    %v50 = vld [vmem:[%s0 + $0xc] sm:$0xff]
    %v51 = vld [vmem:[%s0 + $0x14] sm:$0xf]
    %v52 = vld [vmem:[%s0 + $0x18] sm:$0xff]
    %v53 = vld [vmem:[%s0 + $0x20] sm:$0xf]
    %v54 = vld [vmem:[%s0 + $0x24] sm:$0xff]
    %v55 = vld [vmem:[%s0 + $0x2c] sm:$0xf]
    %v56 = vld [vmem:[%s0 + $0x30] sm:$0xff]
    %v57 = vld [vmem:[%s0 + $0x38] sm:$0xf]
    %v58 = vld [vmem:[%s0 + $0x3c] sm:$0xff]
    %v59 = vld [vmem:[%s0 + $0x44] sm:$0xf]
    %v60 = vld [vmem:[%s0 + $0x48] sm:$0xff]
    %v61 = vld [vmem:[%s0 + $0x50] sm:$0xf]
    %v62 = vld [vmem:[%s0 + $0x54] sm:$0xff]
    %v63 = vld [vmem:[%s0 + $0x5c] sm:$0xf]
    %80 = vst [vmem:[#allocation1] ss:$4 sm:$0xff] %v48
    %s81 = scalar_lea.vmem [#allocation1], 1
    %82 = vst [vmem:[%s81] ss:$4 sm:$0xff] %v50
    %s83 = scalar_lea.vmem [#allocation1], 2
    %84 = vst [vmem:[%s83] ss:$4 sm:$0xff] %v52
    %s85 = scalar_lea.vmem [#allocation1], 3
    %86 = vst [vmem:[%s85] ss:$4 sm:$0xff] %v54
    %s87 = scalar_lea.vmem [#allocation1], 32
    %88 = vst [vmem:[%s87] ss:$4 sm:$0xff] %v49
    %s89 = scalar_lea.vmem [#allocation1], 33
    %90 = vst [vmem:[%s89] ss:$4 sm:$0xff] %v51
    %s91 = scalar_lea.vmem [#allocation1], 34
    %92 = vst [vmem:[%s91] ss:$4 sm:$0xff] %v53
    %s93 = scalar_lea.vmem [#allocation1], 35
    %94 = vst [vmem:[%s93] ss:$4 sm:$0xff] %v55
    %v95 = vld.sshfl [vmem:[#allocation1] sm:$0xff pattern:$0x73625140]
    %v96 = vld.sshfl [vmem:[#allocation1 + $0x8] sm:$0xff pattern:$0x73625140]
    %v97 = vld.sshfl [vmem:[#allocation1 + $0x10] sm:$0xff pattern:$0x73625140]
    %v98 = vld.sshfl [vmem:[#allocation1 + $0x18] sm:$0xff pattern:$0x73625140]
    %v99 = vld.sshfl [vmem:[#allocation1 + $0x20] sm:$0xff pattern:$0x73625140]
    %v100 = vld.sshfl [vmem:[#allocation1 + $0x28] sm:$0xff pattern:$0x73625140]
    %101 = vst [vmem:[#allocation1] ss:$4 sm:$0xff] %v56
    %102 = vst [vmem:[%s81] ss:$4 sm:$0xff] %v58
    %103 = vst [vmem:[%s83] ss:$4 sm:$0xff] %v60
    %104 = vst [vmem:[%s85] ss:$4 sm:$0xff] %v62
    %105 = vst [vmem:[%s87] ss:$4 sm:$0xff] %v57
    %106 = vst [vmem:[%s89] ss:$4 sm:$0xff] %v59
    %107 = vst [vmem:[%s91] ss:$4 sm:$0xff] %v61
    %108 = vst [vmem:[%s93] ss:$4 sm:$0xff] %v63
    %v109 = vld.sshfl [vmem:[#allocation1] sm:$0xff pattern:$0x73625140]
    %v110 = vld.sshfl [vmem:[#allocation1 + $0x8] sm:$0xff pattern:$0x73625140]
    %v111 = vld.sshfl [vmem:[#allocation1 + $0x10] sm:$0xff pattern:$0x73625140]
    %v112 = vld.sshfl [vmem:[#allocation1 + $0x18] sm:$0xff pattern:$0x73625140]
    %v113 = vld.sshfl [vmem:[#allocation1 + $0x20] sm:$0xff pattern:$0x73625140]
    %v114 = vld.sshfl [vmem:[#allocation1 + $0x28] sm:$0xff pattern:$0x73625140]
    %v127 = vpack.c.bf16 %v109, %v95
    %v128 = vpack.c.bf16 %v110, %v96
    %v129 = vpack.c.bf16 %v111, %v97
    %v130 = vpack.c.bf16 %v112, %v98
    %v131 = vpack.c.bf16 %v113, %v99
    %v132 = vpack.c.bf16 %v114, %v100
    %v133 = vld [vmem:[#allocation3] sm:$0xff]
    %v134 = vld [vmem:[#allocation3 + $0x8] sm:$0xff]
    %v135 = vld [vmem:[#allocation3 + $0x10] sm:$0xff]
    %v136 = vld [vmem:[#allocation3 + $0x18] sm:$0xff]
    %v137 = vld [vmem:[#allocation3 + $0x20] sm:$0xff]
    %v138 = vld [vmem:[#allocation3 + $0x28] sm:$0xff]
    %v139 = vld [vmem:[#allocation3 + $0x30] sm:$0xff]
    %v140 = vld [vmem:[#allocation3 + $0x38] sm:$0xff]
    %v141 = vld [vmem:[#allocation3 + $0x40] sm:$0xff]
    %v142 = vld [vmem:[#allocation3 + $0x48] sm:$0xff]
    %v143 = vld [vmem:[#allocation3 + $0x50] sm:$0xff]
    %v144 = vld [vmem:[#allocation3 + $0x58] sm:$0xff]
    %v145 = vld [vmem:[#allocation3 + $0x60] sm:$0xff]
    %v146 = vld [vmem:[#allocation3 + $0x68] sm:$0xff]
    %v147 = vld [vmem:[#allocation3 + $0x70] sm:$0xff]
    %v148 = vld [vmem:[#allocation3 + $0x78] sm:$0xff]
    %v149 = vld [vmem:[#allocation3 + $0x80] sm:$0xff]
    %v150 = vld [vmem:[#allocation3 + $0x88] sm:$0xff]
    %v151 = vld [vmem:[#allocation3 + $0x90] sm:$0xff]
    %v152 = vld [vmem:[#allocation3 + $0x98] sm:$0xff]
    %v153 = vld [vmem:[#allocation3 + $0xa0] sm:$0xff]
    %v154 = vld [vmem:[#allocation3 + $0xa8] sm:$0xff]
    %v155 = vld [vmem:[#allocation3 + $0xb0] sm:$0xff]
    %v156 = vld [vmem:[#allocation3 + $0xb8] sm:$0xff]
    %v157 = vld [vmem:[#allocation3 + $0xc0] sm:$0xff]
    %v158 = vld [vmem:[#allocation3 + $0xc8] sm:$0xff]
    %v159 = vld [vmem:[#allocation3 + $0xd0] sm:$0xff]
    %v160 = vld [vmem:[#allocation3 + $0xd8] sm:$0xff]
    %v161 = vld [vmem:[#allocation3 + $0xe0] sm:$0xff]
    %v162 = vld [vmem:[#allocation3 + $0xe8] sm:$0xff]
    %v163 = vld [vmem:[#allocation3 + $0xf0] sm:$0xff]
    %v164 = vld [vmem:[#allocation3 + $0xf8] sm:$0xff]
    %v165 = vld [vmem:[#allocation3 + $0x100] sm:$0xff]
    %v166 = vld [vmem:[#allocation3 + $0x108] sm:$0xff]
    %v167 = vld [vmem:[#allocation3 + $0x110] sm:$0xff]
    %v168 = vld [vmem:[#allocation3 + $0x118] sm:$0xff]
    %v169 = vld [vmem:[#allocation3 + $0x120] sm:$0xff]
    %v170 = vld [vmem:[#allocation3 + $0x128] sm:$0xff]
    %v171 = vld [vmem:[#allocation3 + $0x130] sm:$0xff]
    %v172 = vld [vmem:[#allocation3 + $0x138] sm:$0xff]
    %v173 = vld [vmem:[#allocation3 + $0x140] sm:$0xff]
    %v174 = vld [vmem:[#allocation3 + $0x148] sm:$0xff]
    %v175 = vld [vmem:[#allocation3 + $0x150] sm:$0xff]
    %v176 = vld [vmem:[#allocation3 + $0x158] sm:$0xff]
    %v177 = vld [vmem:[#allocation3 + $0x160] sm:$0xff]
    %v178 = vld [vmem:[#allocation3 + $0x168] sm:$0xff]
    %v179 = vld [vmem:[#allocation3 + $0x170] sm:$0xff]
    %v180 = vld [vmem:[#allocation3 + $0x178] sm:$0xff]
    %v181 = vld [vmem:[#allocation3 + $0x180] sm:$0xff]
    %v182 = vld [vmem:[#allocation3 + $0x188] sm:$0xff]
    %v183 = vld [vmem:[#allocation3 + $0x190] sm:$0xff]
    %v184 = vld [vmem:[#allocation3 + $0x198] sm:$0xff]
    %v185 = vld [vmem:[#allocation3 + $0x1a0] sm:$0xff]
    %v186 = vld [vmem:[#allocation3 + $0x1a8] sm:$0xff]
    %v187 = vld [vmem:[#allocation3 + $0x1b0] sm:$0xff]
    %v188 = vld [vmem:[#allocation3 + $0x1b8] sm:$0xff]
    %v189 = vld [vmem:[#allocation3 + $0x1c0] sm:$0xff]
    %v190 = vld [vmem:[#allocation3 + $0x1c8] sm:$0xff]
    %v191 = vld [vmem:[#allocation3 + $0x1d0] sm:$0xff]
    %v192 = vld [vmem:[#allocation3 + $0x1d8] sm:$0xff]
    %v193 = vld [vmem:[#allocation3 + $0x1e0] sm:$0xff]
    %v194 = vld [vmem:[#allocation3 + $0x1e8] sm:$0xff]
    %v195 = vld [vmem:[#allocation3 + $0x1f0] sm:$0xff]
    %v196 = vld [vmem:[#allocation3 + $0x1f8] sm:$0xff]
    %v197 = vld [vmem:[#allocation3 + $0x200] sm:$0xff]
    %v198 = vld [vmem:[#allocation3 + $0x208] sm:$0xff]
    %v199 = vld [vmem:[#allocation3 + $0x210] sm:$0xff]
    %v200 = vld [vmem:[#allocation3 + $0x218] sm:$0xff]
    %v201 = vld [vmem:[#allocation3 + $0x220] sm:$0xff]
    %v202 = vld [vmem:[#allocation3 + $0x228] sm:$0xff]
    %v203 = vld [vmem:[#allocation3 + $0x230] sm:$0xff]
    %v204 = vld [vmem:[#allocation3 + $0x238] sm:$0xff]
    %v205 = vld [vmem:[#allocation3 + $0x240] sm:$0xff]
    %v206 = vld [vmem:[#allocation3 + $0x248] sm:$0xff]
    %v207 = vld [vmem:[#allocation3 + $0x250] sm:$0xff]
    %v208 = vld [vmem:[#allocation3 + $0x258] sm:$0xff]
    %v209 = vld [vmem:[#allocation3 + $0x260] sm:$0xff]
    %v210 = vld [vmem:[#allocation3 + $0x268] sm:$0xff]
    %v211 = vld [vmem:[#allocation3 + $0x270] sm:$0xff]
    %v212 = vld [vmem:[#allocation3 + $0x278] sm:$0xff]
    %v213 = vld [vmem:[#allocation3 + $0x280] sm:$0xff]
    %v214 = vld [vmem:[#allocation3 + $0x288] sm:$0xff]
    %v215 = vld [vmem:[#allocation3 + $0x290] sm:$0xff]
    %v216 = vld [vmem:[#allocation3 + $0x298] sm:$0xff]
    %v217 = vld [vmem:[#allocation3 + $0x2a0] sm:$0xff]
    %v218 = vld [vmem:[#allocation3 + $0x2a8] sm:$0xff]
    %v219 = vld [vmem:[#allocation3 + $0x2b0] sm:$0xff]
    %v220 = vld [vmem:[#allocation3 + $0x2b8] sm:$0xff]
    %v221 = vld [vmem:[#allocation3 + $0x2c0] sm:$0xff]
    %v222 = vld [vmem:[#allocation3 + $0x2c8] sm:$0xff]
    %v223 = vld [vmem:[#allocation3 + $0x2d0] sm:$0xff]
    %v224 = vld [vmem:[#allocation3 + $0x2d8] sm:$0xff]
    %v225 = vld [vmem:[#allocation3 + $0x2e0] sm:$0xff]
    %v226 = vld [vmem:[#allocation3 + $0x2e8] sm:$0xff]
    %v227 = vld [vmem:[#allocation3 + $0x2f0] sm:$0xff]
    %v228 = vld [vmem:[#allocation3 + $0x2f8] sm:$0xff]
    %v229 = vld [vmem:[#allocation3 + $0x300] sm:$0xff]
    %v230 = vld [vmem:[#allocation3 + $0x308] sm:$0xff]
    %v231 = vld [vmem:[#allocation3 + $0x310] sm:$0xff]
    %v232 = vld [vmem:[#allocation3 + $0x318] sm:$0xff]
    %v233 = vld [vmem:[#allocation3 + $0x320] sm:$0xff]
    %v234 = vld [vmem:[#allocation3 + $0x328] sm:$0xff]
    %v235 = vld [vmem:[#allocation3 + $0x330] sm:$0xff]
    %v236 = vld [vmem:[#allocation3 + $0x338] sm:$0xff]
    %v237 = vld [vmem:[#allocation3 + $0x340] sm:$0xff]
    %v238 = vld [vmem:[#allocation3 + $0x348] sm:$0xff]
    %v239 = vld [vmem:[#allocation3 + $0x350] sm:$0xff]
    %v240 = vld [vmem:[#allocation3 + $0x358] sm:$0xff]
    %v241 = vld [vmem:[#allocation3 + $0x360] sm:$0xff]
    %v242 = vld [vmem:[#allocation3 + $0x368] sm:$0xff]
    %v243 = vld [vmem:[#allocation3 + $0x370] sm:$0xff]
    %v244 = vld [vmem:[#allocation3 + $0x378] sm:$0xff]
    %v245 = vld [vmem:[#allocation3 + $0x380] sm:$0xff]
    %v246 = vld [vmem:[#allocation3 + $0x388] sm:$0xff]
    %v247 = vld [vmem:[#allocation3 + $0x390] sm:$0xff]
    %v248 = vld [vmem:[#allocation3 + $0x398] sm:$0xff]
    %v249 = vld [vmem:[#allocation3 + $0x3a0] sm:$0xff]
    %v250 = vld [vmem:[#allocation3 + $0x3a8] sm:$0xff]
    %v251 = vld [vmem:[#allocation3 + $0x3b0] sm:$0xff]
    %v252 = vld [vmem:[#allocation3 + $0x3b8] sm:$0xff]
    %v253 = vld [vmem:[#allocation3 + $0x3c0] sm:$0xff]
    %v254 = vld [vmem:[#allocation3 + $0x3c8] sm:$0xff]
    %v255 = vld [vmem:[#allocation3 + $0x3d0] sm:$0xff]
    %v256 = vld [vmem:[#allocation3 + $0x3d8] sm:$0xff]
    %v257 = vld [vmem:[#allocation3 + $0x3e0] sm:$0xff]
    %v258 = vld [vmem:[#allocation3 + $0x3e8] sm:$0xff]
    %v259 = vld [vmem:[#allocation3 + $0x3f0] sm:$0xff]
    %v260 = vld [vmem:[#allocation3 + $0x3f8] sm:$0xff]
    %v261 = vld [vmem:[#allocation3 + $0x400] sm:$0xff]
    %v262 = vld [vmem:[#allocation3 + $0x408] sm:$0xff]
    %v263 = vld [vmem:[#allocation3 + $0x410] sm:$0xff]
    %v264 = vld [vmem:[#allocation3 + $0x418] sm:$0xff]
    %v265 = vld [vmem:[#allocation3 + $0x420] sm:$0xff]
    %v266 = vld [vmem:[#allocation3 + $0x428] sm:$0xff]
    %v267 = vld [vmem:[#allocation3 + $0x430] sm:$0xff]
    %v268 = vld [vmem:[#allocation3 + $0x438] sm:$0xff]
    %v269 = vld [vmem:[#allocation3 + $0x440] sm:$0xff]
    %v270 = vld [vmem:[#allocation3 + $0x448] sm:$0xff]
    %v271 = vld [vmem:[#allocation3 + $0x450] sm:$0xff]
    %v272 = vld [vmem:[#allocation3 + $0x458] sm:$0xff]
    %v273 = vld [vmem:[#allocation3 + $0x460] sm:$0xff]
    %v274 = vld [vmem:[#allocation3 + $0x468] sm:$0xff]
    %v275 = vld [vmem:[#allocation3 + $0x470] sm:$0xff]
    %v276 = vld [vmem:[#allocation3 + $0x478] sm:$0xff]
    %v277 = vld [vmem:[#allocation3 + $0x480] sm:$0xff]
    %v278 = vld [vmem:[#allocation3 + $0x488] sm:$0xff]
    %v279 = vld [vmem:[#allocation3 + $0x490] sm:$0xff]
    %v280 = vld [vmem:[#allocation3 + $0x498] sm:$0xff]
    %v281 = vld [vmem:[#allocation3 + $0x4a0] sm:$0xff]
    %v282 = vld [vmem:[#allocation3 + $0x4a8] sm:$0xff]
    %v283 = vld [vmem:[#allocation3 + $0x4b0] sm:$0xff]
    %v284 = vld [vmem:[#allocation3 + $0x4b8] sm:$0xff]
    %v285 = vld [vmem:[#allocation3 + $0x4c0] sm:$0xff]
    %v286 = vld [vmem:[#allocation3 + $0x4c8] sm:$0xff]
    %v287 = vld [vmem:[#allocation3 + $0x4d0] sm:$0xff]
    %v288 = vld [vmem:[#allocation3 + $0x4d8] sm:$0xff]
    %v289 = vld [vmem:[#allocation3 + $0x4e0] sm:$0xff]
    %v290 = vld [vmem:[#allocation3 + $0x4e8] sm:$0xff]
    %v291 = vld [vmem:[#allocation3 + $0x4f0] sm:$0xff]
    %v292 = vld [vmem:[#allocation3 + $0x4f8] sm:$0xff]
    %v293 = vld [vmem:[#allocation3 + $0x500] sm:$0xff]
    %v294 = vld [vmem:[#allocation3 + $0x508] sm:$0xff]
    %v295 = vld [vmem:[#allocation3 + $0x510] sm:$0xff]
    %v296 = vld [vmem:[#allocation3 + $0x518] sm:$0xff]
    %v297 = vld [vmem:[#allocation3 + $0x520] sm:$0xff]
    %v298 = vld [vmem:[#allocation3 + $0x528] sm:$0xff]
    %v299 = vld [vmem:[#allocation3 + $0x530] sm:$0xff]
    %v300 = vld [vmem:[#allocation3 + $0x538] sm:$0xff]
    %v301 = vld [vmem:[#allocation3 + $0x540] sm:$0xff]
    %v302 = vld [vmem:[#allocation3 + $0x548] sm:$0xff]
    %v303 = vld [vmem:[#allocation3 + $0x550] sm:$0xff]
    %v304 = vld [vmem:[#allocation3 + $0x558] sm:$0xff]
    %v305 = vld [vmem:[#allocation3 + $0x560] sm:$0xff]
    %v306 = vld [vmem:[#allocation3 + $0x568] sm:$0xff]
    %v307 = vld [vmem:[#allocation3 + $0x570] sm:$0xff]
    %v308 = vld [vmem:[#allocation3 + $0x578] sm:$0xff]
    %v309 = vld [vmem:[#allocation3 + $0x580] sm:$0xff]
    %v310 = vld [vmem:[#allocation3 + $0x588] sm:$0xff]
    %v311 = vld [vmem:[#allocation3 + $0x590] sm:$0xff]
    %v312 = vld [vmem:[#allocation3 + $0x598] sm:$0xff]
    %v313 = vld [vmem:[#allocation3 + $0x5a0] sm:$0xff]
    %v314 = vld [vmem:[#allocation3 + $0x5a8] sm:$0xff]
    %v315 = vld [vmem:[#allocation3 + $0x5b0] sm:$0xff]
    %v316 = vld [vmem:[#allocation3 + $0x5b8] sm:$0xff]
    %v317 = vld [vmem:[#allocation3 + $0x5c0] sm:$0xff]
    %v318 = vld [vmem:[#allocation3 + $0x5c8] sm:$0xff]
    %v319 = vld [vmem:[#allocation3 + $0x5d0] sm:$0xff]
    %v320 = vld [vmem:[#allocation3 + $0x5d8] sm:$0xff]
    %v321 = vld [vmem:[#allocation3 + $0x5e0] sm:$0xff]
    %v322 = vld [vmem:[#allocation3 + $0x5e8] sm:$0xff]
    %v323 = vld [vmem:[#allocation3 + $0x5f0] sm:$0xff]
    %v324 = vld [vmem:[#allocation3 + $0x5f8] sm:$0xff]
    %v325 = vld [vmem:[#allocation3 + $0x600] sm:$0xff]
    %v326 = vld [vmem:[#allocation3 + $0x608] sm:$0xff]
    %v327 = vld [vmem:[#allocation3 + $0x610] sm:$0xff]
    %v328 = vld [vmem:[#allocation3 + $0x618] sm:$0xff]
    %v329 = vld [vmem:[#allocation3 + $0x620] sm:$0xff]
    %v330 = vld [vmem:[#allocation3 + $0x628] sm:$0xff]
    %v331 = vld [vmem:[#allocation3 + $0x630] sm:$0xff]
    %v332 = vld [vmem:[#allocation3 + $0x638] sm:$0xff]
    %v333 = vld [vmem:[#allocation3 + $0x640] sm:$0xff]
    %v334 = vld [vmem:[#allocation3 + $0x648] sm:$0xff]
    %v335 = vld [vmem:[#allocation3 + $0x650] sm:$0xff]
    %v336 = vld [vmem:[#allocation3 + $0x658] sm:$0xff]
    %v337 = vld [vmem:[#allocation3 + $0x660] sm:$0xff]
    %v338 = vld [vmem:[#allocation3 + $0x668] sm:$0xff]
    %v339 = vld [vmem:[#allocation3 + $0x670] sm:$0xff]
    %v340 = vld [vmem:[#allocation3 + $0x678] sm:$0xff]
    %v341 = vld [vmem:[#allocation3 + $0x680] sm:$0xff]
    %v342 = vld [vmem:[#allocation3 + $0x688] sm:$0xff]
    %v343 = vld [vmem:[#allocation3 + $0x690] sm:$0xff]
    %v344 = vld [vmem:[#allocation3 + $0x698] sm:$0xff]
    %v345 = vld [vmem:[#allocation3 + $0x6a0] sm:$0xff]
    %v346 = vld [vmem:[#allocation3 + $0x6a8] sm:$0xff]
    %v347 = vld [vmem:[#allocation3 + $0x6b0] sm:$0xff]
    %v348 = vld [vmem:[#allocation3 + $0x6b8] sm:$0xff]
    %v349 = vld [vmem:[#allocation3 + $0x6c0] sm:$0xff]
    %v350 = vld [vmem:[#allocation3 + $0x6c8] sm:$0xff]
    %v351 = vld [vmem:[#allocation3 + $0x6d0] sm:$0xff]
    %v352 = vld [vmem:[#allocation3 + $0x6d8] sm:$0xff]
    %v353 = vld [vmem:[#allocation3 + $0x6e0] sm:$0xff]
    %v354 = vld [vmem:[#allocation3 + $0x6e8] sm:$0xff]
    %v355 = vld [vmem:[#allocation3 + $0x6f0] sm:$0xff]
    %v356 = vld [vmem:[#allocation3 + $0x6f8] sm:$0xff]
    %v357 = vld [vmem:[#allocation3 + $0x700] sm:$0xff]
    %v358 = vld [vmem:[#allocation3 + $0x708] sm:$0xff]
    %v359 = vld [vmem:[#allocation3 + $0x710] sm:$0xff]
    %v360 = vld [vmem:[#allocation3 + $0x718] sm:$0xff]
    %v361 = vld [vmem:[#allocation3 + $0x720] sm:$0xff]
    %v362 = vld [vmem:[#allocation3 + $0x728] sm:$0xff]
    %v363 = vld [vmem:[#allocation3 + $0x730] sm:$0xff]
    %v364 = vld [vmem:[#allocation3 + $0x738] sm:$0xff]
    %v365 = vld [vmem:[#allocation3 + $0x740] sm:$0xff]
    %v366 = vld [vmem:[#allocation3 + $0x748] sm:$0xff]
    %v367 = vld [vmem:[#allocation3 + $0x750] sm:$0xff]
    %v368 = vld [vmem:[#allocation3 + $0x758] sm:$0xff]
    %v369 = vld [vmem:[#allocation3 + $0x760] sm:$0xff]
    %v370 = vld [vmem:[#allocation3 + $0x768] sm:$0xff]
    %v371 = vld [vmem:[#allocation3 + $0x770] sm:$0xff]
    %v372 = vld [vmem:[#allocation3 + $0x778] sm:$0xff]
    %v373 = vld [vmem:[#allocation3 + $0x780] sm:$0xff]
    %v374 = vld [vmem:[#allocation3 + $0x788] sm:$0xff]
    %v375 = vld [vmem:[#allocation3 + $0x790] sm:$0xff]
    %v376 = vld [vmem:[#allocation3 + $0x798] sm:$0xff]
    %v377 = vld [vmem:[#allocation3 + $0x7a0] sm:$0xff]
    %v378 = vld [vmem:[#allocation3 + $0x7a8] sm:$0xff]
    %v379 = vld [vmem:[#allocation3 + $0x7b0] sm:$0xff]
    %v380 = vld [vmem:[#allocation3 + $0x7b8] sm:$0xff]
    %v381 = vld [vmem:[#allocation3 + $0x7c0] sm:$0xff]
    %v382 = vld [vmem:[#allocation3 + $0x7c8] sm:$0xff]
    %v383 = vld [vmem:[#allocation3 + $0x7d0] sm:$0xff]
    %v384 = vld [vmem:[#allocation3 + $0x7d8] sm:$0xff]
    %v385 = vld [vmem:[#allocation3 + $0x7e0] sm:$0xff]
    %v386 = vld [vmem:[#allocation3 + $0x7e8] sm:$0xff]
    %v387 = vld [vmem:[#allocation3 + $0x7f0] sm:$0xff]
    %v388 = vld [vmem:[#allocation3 + $0x7f8] sm:$0xff]
    %v389 = vld [vmem:[#allocation3 + $0x800] sm:$0xff]
    %v390 = vld [vmem:[#allocation3 + $0x808] sm:$0xff]
    %v391 = vld [vmem:[#allocation3 + $0x810] sm:$0xff]
    %v392 = vld [vmem:[#allocation3 + $0x818] sm:$0xff]
    %v393 = vld [vmem:[#allocation3 + $0x820] sm:$0xff]
    %v394 = vld [vmem:[#allocation3 + $0x828] sm:$0xff]
    %v395 = vld [vmem:[#allocation3 + $0x830] sm:$0xff]
    %v396 = vld [vmem:[#allocation3 + $0x838] sm:$0xff]
    %v397 = vld [vmem:[#allocation3 + $0x840] sm:$0xff]
    %v398 = vld [vmem:[#allocation3 + $0x848] sm:$0xff]
    %v399 = vld [vmem:[#allocation3 + $0x850] sm:$0xff]
    %v400 = vld [vmem:[#allocation3 + $0x858] sm:$0xff]
    %v401 = vld [vmem:[#allocation3 + $0x860] sm:$0xff]
    %v402 = vld [vmem:[#allocation3 + $0x868] sm:$0xff]
    %v403 = vld [vmem:[#allocation3 + $0x870] sm:$0xff]
    %v404 = vld [vmem:[#allocation3 + $0x878] sm:$0xff]
    %v405 = vld [vmem:[#allocation3 + $0x880] sm:$0xff]
    %v406 = vld [vmem:[#allocation3 + $0x888] sm:$0xff]
    %v407 = vld [vmem:[#allocation3 + $0x890] sm:$0xff]
    %v408 = vld [vmem:[#allocation3 + $0x898] sm:$0xff]
    %v409 = vld [vmem:[#allocation3 + $0x8a0] sm:$0xff]
    %v410 = vld [vmem:[#allocation3 + $0x8a8] sm:$0xff]
    %v411 = vld [vmem:[#allocation3 + $0x8b0] sm:$0xff]
    %v412 = vld [vmem:[#allocation3 + $0x8b8] sm:$0xff]
    %v413 = vld [vmem:[#allocation3 + $0x8c0] sm:$0xff]
    %v414 = vld [vmem:[#allocation3 + $0x8c8] sm:$0xff]
    %v415 = vld [vmem:[#allocation3 + $0x8d0] sm:$0xff]
    %v416 = vld [vmem:[#allocation3 + $0x8d8] sm:$0xff]
    %v417 = vld [vmem:[#allocation3 + $0x8e0] sm:$0xff]
    %v418 = vld [vmem:[#allocation3 + $0x8e8] sm:$0xff]
    %v419 = vld [vmem:[#allocation3 + $0x8f0] sm:$0xff]
    %v420 = vld [vmem:[#allocation3 + $0x8f8] sm:$0xff]
    %v421 = vld [vmem:[#allocation3 + $0x900] sm:$0xff]
    %v422 = vld [vmem:[#allocation3 + $0x908] sm:$0xff]
    %v423 = vld [vmem:[#allocation3 + $0x910] sm:$0xff]
    %v424 = vld [vmem:[#allocation3 + $0x918] sm:$0xff]
    %v425 = vld [vmem:[#allocation3 + $0x920] sm:$0xff]
    %v426 = vld [vmem:[#allocation3 + $0x928] sm:$0xff]
    %v427 = vld [vmem:[#allocation3 + $0x930] sm:$0xff]
    %v428 = vld [vmem:[#allocation3 + $0x938] sm:$0xff]
    %v429 = vld [vmem:[#allocation3 + $0x940] sm:$0xff]
    %v430 = vld [vmem:[#allocation3 + $0x948] sm:$0xff]
    %v431 = vld [vmem:[#allocation3 + $0x950] sm:$0xff]
    %v432 = vld [vmem:[#allocation3 + $0x958] sm:$0xff]
    %v433 = vld [vmem:[#allocation3 + $0x960] sm:$0xff]
    %v434 = vld [vmem:[#allocation3 + $0x968] sm:$0xff]
    %v435 = vld [vmem:[#allocation3 + $0x970] sm:$0xff]
    %v436 = vld [vmem:[#allocation3 + $0x978] sm:$0xff]
    %v437 = vld [vmem:[#allocation3 + $0x980] sm:$0xff]
    %v438 = vld [vmem:[#allocation3 + $0x988] sm:$0xff]
    %v439 = vld [vmem:[#allocation3 + $0x990] sm:$0xff]
    %v440 = vld [vmem:[#allocation3 + $0x998] sm:$0xff]
    %v441 = vld [vmem:[#allocation3 + $0x9a0] sm:$0xff]
    %v442 = vld [vmem:[#allocation3 + $0x9a8] sm:$0xff]
    %v443 = vld [vmem:[#allocation3 + $0x9b0] sm:$0xff]
    %v444 = vld [vmem:[#allocation3 + $0x9b8] sm:$0xff]
    %v445 = vld [vmem:[#allocation3 + $0x9c0] sm:$0xff]
    %v446 = vld [vmem:[#allocation3 + $0x9c8] sm:$0xff]
    %v447 = vld [vmem:[#allocation3 + $0x9d0] sm:$0xff]
    %v448 = vld [vmem:[#allocation3 + $0x9d8] sm:$0xff]
    %v449 = vld [vmem:[#allocation3 + $0x9e0] sm:$0xff]
    %v450 = vld [vmem:[#allocation3 + $0x9e8] sm:$0xff]
    %v451 = vld [vmem:[#allocation3 + $0x9f0] sm:$0xff]
    %v452 = vld [vmem:[#allocation3 + $0x9f8] sm:$0xff]
    %v453 = vld [vmem:[#allocation3 + $0xa00] sm:$0xff]
    %v454 = vld [vmem:[#allocation3 + $0xa08] sm:$0xff]
    %v455 = vld [vmem:[#allocation3 + $0xa10] sm:$0xff]
    %v456 = vld [vmem:[#allocation3 + $0xa18] sm:$0xff]
    %v457 = vld [vmem:[#allocation3 + $0xa20] sm:$0xff]
    %v458 = vld [vmem:[#allocation3 + $0xa28] sm:$0xff]
    %v459 = vld [vmem:[#allocation3 + $0xa30] sm:$0xff]
    %v460 = vld [vmem:[#allocation3 + $0xa38] sm:$0xff]
    %v461 = vld [vmem:[#allocation3 + $0xa40] sm:$0xff]
    %v462 = vld [vmem:[#allocation3 + $0xa48] sm:$0xff]
    %v463 = vld [vmem:[#allocation3 + $0xa50] sm:$0xff]
    %v464 = vld [vmem:[#allocation3 + $0xa58] sm:$0xff]
    %v465 = vld [vmem:[#allocation3 + $0xa60] sm:$0xff]
    %v466 = vld [vmem:[#allocation3 + $0xa68] sm:$0xff]
    %v467 = vld [vmem:[#allocation3 + $0xa70] sm:$0xff]
    %v468 = vld [vmem:[#allocation3 + $0xa78] sm:$0xff]
    %v469 = vld [vmem:[#allocation3 + $0xa80] sm:$0xff]
    %v470 = vld [vmem:[#allocation3 + $0xa88] sm:$0xff]
    %v471 = vld [vmem:[#allocation3 + $0xa90] sm:$0xff]
    %v472 = vld [vmem:[#allocation3 + $0xa98] sm:$0xff]
    %v473 = vld [vmem:[#allocation3 + $0xaa0] sm:$0xff]
    %v474 = vld [vmem:[#allocation3 + $0xaa8] sm:$0xff]
    %v475 = vld [vmem:[#allocation3 + $0xab0] sm:$0xff]
    %v476 = vld [vmem:[#allocation3 + $0xab8] sm:$0xff]
    %v477 = vld [vmem:[#allocation3 + $0xac0] sm:$0xff]
    %v478 = vld [vmem:[#allocation3 + $0xac8] sm:$0xff]
    %v479 = vld [vmem:[#allocation3 + $0xad0] sm:$0xff]
    %v480 = vld [vmem:[#allocation3 + $0xad8] sm:$0xff]
    %v481 = vld [vmem:[#allocation3 + $0xae0] sm:$0xff]
    %v482 = vld [vmem:[#allocation3 + $0xae8] sm:$0xff]
    %v483 = vld [vmem:[#allocation3 + $0xaf0] sm:$0xff]
    %v484 = vld [vmem:[#allocation3 + $0xaf8] sm:$0xff]
    %v485 = vld [vmem:[#allocation3 + $0xb00] sm:$0xff]
    %v486 = vld [vmem:[#allocation3 + $0xb08] sm:$0xff]
    %v487 = vld [vmem:[#allocation3 + $0xb10] sm:$0xff]
    %v488 = vld [vmem:[#allocation3 + $0xb18] sm:$0xff]
    %v489 = vld [vmem:[#allocation3 + $0xb20] sm:$0xff]
    %v490 = vld [vmem:[#allocation3 + $0xb28] sm:$0xff]
    %v491 = vld [vmem:[#allocation3 + $0xb30] sm:$0xff]
    %v492 = vld [vmem:[#allocation3 + $0xb38] sm:$0xff]
    %v493 = vld [vmem:[#allocation3 + $0xb40] sm:$0xff]
    %v494 = vld [vmem:[#allocation3 + $0xb48] sm:$0xff]
    %v495 = vld [vmem:[#allocation3 + $0xb50] sm:$0xff]
    %v496 = vld [vmem:[#allocation3 + $0xb58] sm:$0xff]
    %v497 = vld [vmem:[#allocation3 + $0xb60] sm:$0xff]
    %v498 = vld [vmem:[#allocation3 + $0xb68] sm:$0xff]
    %v499 = vld [vmem:[#allocation3 + $0xb70] sm:$0xff]
    %v500 = vld [vmem:[#allocation3 + $0xb78] sm:$0xff]
    %v501 = vld [vmem:[#allocation3 + $0xb80] sm:$0xff]
    %v502 = vld [vmem:[#allocation3 + $0xb88] sm:$0xff]
    %v503 = vld [vmem:[#allocation3 + $0xb90] sm:$0xff]
    %v504 = vld [vmem:[#allocation3 + $0xb98] sm:$0xff]
    %v505 = vld [vmem:[#allocation3 + $0xba0] sm:$0xff]
    %v506 = vld [vmem:[#allocation3 + $0xba8] sm:$0xff]
    %v507 = vld [vmem:[#allocation3 + $0xbb0] sm:$0xff]
    %v508 = vld [vmem:[#allocation3 + $0xbb8] sm:$0xff]
    %v509 = vld [vmem:[#allocation3 + $0xbc0] sm:$0xff]
    %v510 = vld [vmem:[#allocation3 + $0xbc8] sm:$0xff]
    %v511 = vld [vmem:[#allocation3 + $0xbd0] sm:$0xff]
    %v512 = vld [vmem:[#allocation3 + $0xbd8] sm:$0xff]
    %v513 = vld [vmem:[#allocation3 + $0xbe0] sm:$0xff]
    %v514 = vld [vmem:[#allocation3 + $0xbe8] sm:$0xff]
    %v515 = vld [vmem:[#allocation3 + $0xbf0] sm:$0xff]
    %v516 = vld [vmem:[#allocation3 + $0xbf8] sm:$0xff]
    %v901 = vunpack.c.l.b16 %v133
    %v902 = vunpack.c.h.b16 %v133
    %v903 = vunpack.c.l.b16 %v134
    %v904 = vunpack.c.h.b16 %v134
    %v905 = vunpack.c.l.b16 %v135
    %v906 = vunpack.c.h.b16 %v135
    %v907 = vunpack.c.l.b16 %v136
    %v908 = vunpack.c.h.b16 %v136
    %v909 = vunpack.c.l.b16 %v137
    %v910 = vunpack.c.h.b16 %v137
    %v911 = vunpack.c.l.b16 %v138
    %v912 = vunpack.c.h.b16 %v138
    %v913 = vunpack.c.l.b16 %v139
    %v914 = vunpack.c.h.b16 %v139
    %v915 = vunpack.c.l.b16 %v140
    %v916 = vunpack.c.h.b16 %v140
    %v917 = vunpack.c.l.b16 %v141
    %v918 = vunpack.c.h.b16 %v141
    %v919 = vunpack.c.l.b16 %v142
    %v920 = vunpack.c.h.b16 %v142
    %v921 = vunpack.c.l.b16 %v143
    %v922 = vunpack.c.h.b16 %v143
    %v923 = vunpack.c.l.b16 %v144
    %v924 = vunpack.c.h.b16 %v144
    %v925 = vunpack.c.l.b16 %v145
    %v926 = vunpack.c.h.b16 %v145
    %v927 = vunpack.c.l.b16 %v146
    %v928 = vunpack.c.h.b16 %v146
    %v929 = vunpack.c.l.b16 %v147
    %v930 = vunpack.c.h.b16 %v147
    %v931 = vunpack.c.l.b16 %v148
    %v932 = vunpack.c.h.b16 %v148
    %v933 = vunpack.c.l.b16 %v149
    %v934 = vunpack.c.h.b16 %v149
    %v935 = vunpack.c.l.b16 %v150
    %v936 = vunpack.c.h.b16 %v150
    %v937 = vunpack.c.l.b16 %v151
    %v938 = vunpack.c.h.b16 %v151
    %v939 = vunpack.c.l.b16 %v152
    %v940 = vunpack.c.h.b16 %v152
    %v941 = vunpack.c.l.b16 %v153
    %v942 = vunpack.c.h.b16 %v153
    %v943 = vunpack.c.l.b16 %v154
    %v944 = vunpack.c.h.b16 %v154
    %v945 = vunpack.c.l.b16 %v155
    %v946 = vunpack.c.h.b16 %v155
    %v947 = vunpack.c.l.b16 %v156
    %v948 = vunpack.c.h.b16 %v156
    %v949 = vunpack.c.l.b16 %v157
    %v950 = vunpack.c.h.b16 %v157
    %v951 = vunpack.c.l.b16 %v158
    %v952 = vunpack.c.h.b16 %v158
    %v953 = vunpack.c.l.b16 %v159
    %v954 = vunpack.c.h.b16 %v159
    %v955 = vunpack.c.l.b16 %v160
    %v956 = vunpack.c.h.b16 %v160
    %v957 = vunpack.c.l.b16 %v161
    %v958 = vunpack.c.h.b16 %v161
    %v959 = vunpack.c.l.b16 %v162
    %v960 = vunpack.c.h.b16 %v162
    %v961 = vunpack.c.l.b16 %v163
    %v962 = vunpack.c.h.b16 %v163
    %v963 = vunpack.c.l.b16 %v164
    %v964 = vunpack.c.h.b16 %v164
    %v965 = vunpack.c.l.b16 %v165
    %v966 = vunpack.c.h.b16 %v165
    %v967 = vunpack.c.l.b16 %v166
    %v968 = vunpack.c.h.b16 %v166
    %v969 = vunpack.c.l.b16 %v167
    %v970 = vunpack.c.h.b16 %v167
    %v971 = vunpack.c.l.b16 %v168
    %v972 = vunpack.c.h.b16 %v168
    %v973 = vunpack.c.l.b16 %v169
    %v974 = vunpack.c.h.b16 %v169
    %v975 = vunpack.c.l.b16 %v170
    %v976 = vunpack.c.h.b16 %v170
    %v977 = vunpack.c.l.b16 %v171
    %v978 = vunpack.c.h.b16 %v171
    %v979 = vunpack.c.l.b16 %v172
    %v980 = vunpack.c.h.b16 %v172
    %v981 = vunpack.c.l.b16 %v173
    %v982 = vunpack.c.h.b16 %v173
    %v983 = vunpack.c.l.b16 %v174
    %v984 = vunpack.c.h.b16 %v174
    %v985 = vunpack.c.l.b16 %v175
    %v986 = vunpack.c.h.b16 %v175
    %v987 = vunpack.c.l.b16 %v176
    %v988 = vunpack.c.h.b16 %v176
    %v989 = vunpack.c.l.b16 %v177
    %v990 = vunpack.c.h.b16 %v177
    %v991 = vunpack.c.l.b16 %v178
    %v992 = vunpack.c.h.b16 %v178
    %v993 = vunpack.c.l.b16 %v179
    %v994 = vunpack.c.h.b16 %v179
    %v995 = vunpack.c.l.b16 %v180
    %v996 = vunpack.c.h.b16 %v180
    %v997 = vunpack.c.l.b16 %v181
    %v998 = vunpack.c.h.b16 %v181
    %v999 = vunpack.c.l.b16 %v182
    %v1000 = vunpack.c.h.b16 %v182
    %v1001 = vunpack.c.l.b16 %v183
    %v1002 = vunpack.c.h.b16 %v183
    %v1003 = vunpack.c.l.b16 %v184
    %v1004 = vunpack.c.h.b16 %v184
    %v1005 = vunpack.c.l.b16 %v185
    %v1006 = vunpack.c.h.b16 %v185
    %v1007 = vunpack.c.l.b16 %v186
    %v1008 = vunpack.c.h.b16 %v186
    %v1009 = vunpack.c.l.b16 %v187
    %v1010 = vunpack.c.h.b16 %v187
    %v1011 = vunpack.c.l.b16 %v188
    %v1012 = vunpack.c.h.b16 %v188
    %v1013 = vunpack.c.l.b16 %v189
    %v1014 = vunpack.c.h.b16 %v189
    %v1015 = vunpack.c.l.b16 %v190
    %v1016 = vunpack.c.h.b16 %v190
    %v1017 = vunpack.c.l.b16 %v191
    %v1018 = vunpack.c.h.b16 %v191
    %v1019 = vunpack.c.l.b16 %v192
    %v1020 = vunpack.c.h.b16 %v192
    %v1021 = vunpack.c.l.b16 %v193
    %v1022 = vunpack.c.h.b16 %v193
    %v1023 = vunpack.c.l.b16 %v194
    %v1024 = vunpack.c.h.b16 %v194
    %v1025 = vunpack.c.l.b16 %v195
    %v1026 = vunpack.c.h.b16 %v195
    %v1027 = vunpack.c.l.b16 %v196
    %v1028 = vunpack.c.h.b16 %v196
    %v1029 = vunpack.c.l.b16 %v197
    %v1030 = vunpack.c.h.b16 %v197
    %v1031 = vunpack.c.l.b16 %v198
    %v1032 = vunpack.c.h.b16 %v198
    %v1033 = vunpack.c.l.b16 %v199
    %v1034 = vunpack.c.h.b16 %v199
    %v1035 = vunpack.c.l.b16 %v200
    %v1036 = vunpack.c.h.b16 %v200
    %v1037 = vunpack.c.l.b16 %v201
    %v1038 = vunpack.c.h.b16 %v201
    %v1039 = vunpack.c.l.b16 %v202
    %v1040 = vunpack.c.h.b16 %v202
    %v1041 = vunpack.c.l.b16 %v203
    %v1042 = vunpack.c.h.b16 %v203
    %v1043 = vunpack.c.l.b16 %v204
    %v1044 = vunpack.c.h.b16 %v204
    %v1045 = vunpack.c.l.b16 %v205
    %v1046 = vunpack.c.h.b16 %v205
    %v1047 = vunpack.c.l.b16 %v206
    %v1048 = vunpack.c.h.b16 %v206
    %v1049 = vunpack.c.l.b16 %v207
    %v1050 = vunpack.c.h.b16 %v207
    %v1051 = vunpack.c.l.b16 %v208
    %v1052 = vunpack.c.h.b16 %v208
    %v1053 = vunpack.c.l.b16 %v209
    %v1054 = vunpack.c.h.b16 %v209
    %v1055 = vunpack.c.l.b16 %v210
    %v1056 = vunpack.c.h.b16 %v210
    %v1057 = vunpack.c.l.b16 %v211
    %v1058 = vunpack.c.h.b16 %v211
    %v1059 = vunpack.c.l.b16 %v212
    %v1060 = vunpack.c.h.b16 %v212
    %v1061 = vunpack.c.l.b16 %v213
    %v1062 = vunpack.c.h.b16 %v213
    %v1063 = vunpack.c.l.b16 %v214
    %v1064 = vunpack.c.h.b16 %v214
    %v1065 = vunpack.c.l.b16 %v215
    %v1066 = vunpack.c.h.b16 %v215
    %v1067 = vunpack.c.l.b16 %v216
    %v1068 = vunpack.c.h.b16 %v216
    %v1069 = vunpack.c.l.b16 %v217
    %v1070 = vunpack.c.h.b16 %v217
    %v1071 = vunpack.c.l.b16 %v218
    %v1072 = vunpack.c.h.b16 %v218
    %v1073 = vunpack.c.l.b16 %v219
    %v1074 = vunpack.c.h.b16 %v219
    %v1075 = vunpack.c.l.b16 %v220
    %v1076 = vunpack.c.h.b16 %v220
    %v1077 = vunpack.c.l.b16 %v221
    %v1078 = vunpack.c.h.b16 %v221
    %v1079 = vunpack.c.l.b16 %v222
    %v1080 = vunpack.c.h.b16 %v222
    %v1081 = vunpack.c.l.b16 %v223
    %v1082 = vunpack.c.h.b16 %v223
    %v1083 = vunpack.c.l.b16 %v224
    %v1084 = vunpack.c.h.b16 %v224
    %v1085 = vunpack.c.l.b16 %v225
    %v1086 = vunpack.c.h.b16 %v225
    %v1087 = vunpack.c.l.b16 %v226
    %v1088 = vunpack.c.h.b16 %v226
    %v1089 = vunpack.c.l.b16 %v227
    %v1090 = vunpack.c.h.b16 %v227
    %v1091 = vunpack.c.l.b16 %v228
    %v1092 = vunpack.c.h.b16 %v228
    %v1093 = vunpack.c.l.b16 %v229
    %v1094 = vunpack.c.h.b16 %v229
    %v1095 = vunpack.c.l.b16 %v230
    %v1096 = vunpack.c.h.b16 %v230
    %v1097 = vunpack.c.l.b16 %v231
    %v1098 = vunpack.c.h.b16 %v231
    %v1099 = vunpack.c.l.b16 %v232
    %v1100 = vunpack.c.h.b16 %v232
    %v1101 = vunpack.c.l.b16 %v233
    %v1102 = vunpack.c.h.b16 %v233
    %v1103 = vunpack.c.l.b16 %v234
    %v1104 = vunpack.c.h.b16 %v234
    %v1105 = vunpack.c.l.b16 %v235
    %v1106 = vunpack.c.h.b16 %v235
    %v1107 = vunpack.c.l.b16 %v236
    %v1108 = vunpack.c.h.b16 %v236
    %v1109 = vunpack.c.l.b16 %v237
    %v1110 = vunpack.c.h.b16 %v237
    %v1111 = vunpack.c.l.b16 %v238
    %v1112 = vunpack.c.h.b16 %v238
    %v1113 = vunpack.c.l.b16 %v239
    %v1114 = vunpack.c.h.b16 %v239
    %v1115 = vunpack.c.l.b16 %v240
    %v1116 = vunpack.c.h.b16 %v240
    %v1117 = vunpack.c.l.b16 %v241
    %v1118 = vunpack.c.h.b16 %v241
    %v1119 = vunpack.c.l.b16 %v242
    %v1120 = vunpack.c.h.b16 %v242
    %v1121 = vunpack.c.l.b16 %v243
    %v1122 = vunpack.c.h.b16 %v243
    %v1123 = vunpack.c.l.b16 %v244
    %v1124 = vunpack.c.h.b16 %v244
    %v1125 = vunpack.c.l.b16 %v245
    %v1126 = vunpack.c.h.b16 %v245
    %v1127 = vunpack.c.l.b16 %v246
    %v1128 = vunpack.c.h.b16 %v246
    %v1129 = vunpack.c.l.b16 %v247
    %v1130 = vunpack.c.h.b16 %v247
    %v1131 = vunpack.c.l.b16 %v248
    %v1132 = vunpack.c.h.b16 %v248
    %v1133 = vunpack.c.l.b16 %v249
    %v1134 = vunpack.c.h.b16 %v249
    %v1135 = vunpack.c.l.b16 %v250
    %v1136 = vunpack.c.h.b16 %v250
    %v1137 = vunpack.c.l.b16 %v251
    %v1138 = vunpack.c.h.b16 %v251
    %v1139 = vunpack.c.l.b16 %v252
    %v1140 = vunpack.c.h.b16 %v252
    %v1141 = vunpack.c.l.b16 %v253
    %v1142 = vunpack.c.h.b16 %v253
    %v1143 = vunpack.c.l.b16 %v254
    %v1144 = vunpack.c.h.b16 %v254
    %v1145 = vunpack.c.l.b16 %v255
    %v1146 = vunpack.c.h.b16 %v255
    %v1147 = vunpack.c.l.b16 %v256
    %v1148 = vunpack.c.h.b16 %v256
    %v1149 = vunpack.c.l.b16 %v257
    %v1150 = vunpack.c.h.b16 %v257
    %v1151 = vunpack.c.l.b16 %v258
    %v1152 = vunpack.c.h.b16 %v258
    %v1153 = vunpack.c.l.b16 %v259
    %v1154 = vunpack.c.h.b16 %v259
    %v1155 = vunpack.c.l.b16 %v260
    %v1156 = vunpack.c.h.b16 %v260
    %v1157 = vunpack.c.l.b16 %v261
    %v1158 = vunpack.c.h.b16 %v261
    %v1159 = vunpack.c.l.b16 %v262
    %v1160 = vunpack.c.h.b16 %v262
    %v1161 = vunpack.c.l.b16 %v263
    %v1162 = vunpack.c.h.b16 %v263
    %v1163 = vunpack.c.l.b16 %v264
    %v1164 = vunpack.c.h.b16 %v264
    %v1165 = vunpack.c.l.b16 %v265
    %v1166 = vunpack.c.h.b16 %v265
    %v1167 = vunpack.c.l.b16 %v266
    %v1168 = vunpack.c.h.b16 %v266
    %v1169 = vunpack.c.l.b16 %v267
    %v1170 = vunpack.c.h.b16 %v267
    %v1171 = vunpack.c.l.b16 %v268
    %v1172 = vunpack.c.h.b16 %v268
    %v1173 = vunpack.c.l.b16 %v269
    %v1174 = vunpack.c.h.b16 %v269
    %v1175 = vunpack.c.l.b16 %v270
    %v1176 = vunpack.c.h.b16 %v270
    %v1177 = vunpack.c.l.b16 %v271
    %v1178 = vunpack.c.h.b16 %v271
    %v1179 = vunpack.c.l.b16 %v272
    %v1180 = vunpack.c.h.b16 %v272
    %v1181 = vunpack.c.l.b16 %v273
    %v1182 = vunpack.c.h.b16 %v273
    %v1183 = vunpack.c.l.b16 %v274
    %v1184 = vunpack.c.h.b16 %v274
    %v1185 = vunpack.c.l.b16 %v275
    %v1186 = vunpack.c.h.b16 %v275
    %v1187 = vunpack.c.l.b16 %v276
    %v1188 = vunpack.c.h.b16 %v276
    %v1189 = vunpack.c.l.b16 %v277
    %v1190 = vunpack.c.h.b16 %v277
    %v1191 = vunpack.c.l.b16 %v278
    %v1192 = vunpack.c.h.b16 %v278
    %v1193 = vunpack.c.l.b16 %v279
    %v1194 = vunpack.c.h.b16 %v279
    %v1195 = vunpack.c.l.b16 %v280
    %v1196 = vunpack.c.h.b16 %v280
    %v1197 = vunpack.c.l.b16 %v281
    %v1198 = vunpack.c.h.b16 %v281
    %v1199 = vunpack.c.l.b16 %v282
    %v1200 = vunpack.c.h.b16 %v282
    %v1201 = vunpack.c.l.b16 %v283
    %v1202 = vunpack.c.h.b16 %v283
    %v1203 = vunpack.c.l.b16 %v284
    %v1204 = vunpack.c.h.b16 %v284
    %v1205 = vunpack.c.l.b16 %v285
    %v1206 = vunpack.c.h.b16 %v285
    %v1207 = vunpack.c.l.b16 %v286
    %v1208 = vunpack.c.h.b16 %v286
    %v1209 = vunpack.c.l.b16 %v287
    %v1210 = vunpack.c.h.b16 %v287
    %v1211 = vunpack.c.l.b16 %v288
    %v1212 = vunpack.c.h.b16 %v288
    %v1213 = vunpack.c.l.b16 %v289
    %v1214 = vunpack.c.h.b16 %v289
    %v1215 = vunpack.c.l.b16 %v290
    %v1216 = vunpack.c.h.b16 %v290
    %v1217 = vunpack.c.l.b16 %v291
    %v1218 = vunpack.c.h.b16 %v291
    %v1219 = vunpack.c.l.b16 %v292
    %v1220 = vunpack.c.h.b16 %v292
    %v1221 = vunpack.c.l.b16 %v293
    %v1222 = vunpack.c.h.b16 %v293
    %v1223 = vunpack.c.l.b16 %v294
    %v1224 = vunpack.c.h.b16 %v294
    %v1225 = vunpack.c.l.b16 %v295
    %v1226 = vunpack.c.h.b16 %v295
    %v1227 = vunpack.c.l.b16 %v296
    %v1228 = vunpack.c.h.b16 %v296
    %v1229 = vunpack.c.l.b16 %v297
    %v1230 = vunpack.c.h.b16 %v297
    %v1231 = vunpack.c.l.b16 %v298
    %v1232 = vunpack.c.h.b16 %v298
    %v1233 = vunpack.c.l.b16 %v299
    %v1234 = vunpack.c.h.b16 %v299
    %v1235 = vunpack.c.l.b16 %v300
    %v1236 = vunpack.c.h.b16 %v300
    %v1237 = vunpack.c.l.b16 %v301
    %v1238 = vunpack.c.h.b16 %v301
    %v1239 = vunpack.c.l.b16 %v302
    %v1240 = vunpack.c.h.b16 %v302
    %v1241 = vunpack.c.l.b16 %v303
    %v1242 = vunpack.c.h.b16 %v303
    %v1243 = vunpack.c.l.b16 %v304
    %v1244 = vunpack.c.h.b16 %v304
    %v1245 = vunpack.c.l.b16 %v305
    %v1246 = vunpack.c.h.b16 %v305
    %v1247 = vunpack.c.l.b16 %v306
    %v1248 = vunpack.c.h.b16 %v306
    %v1249 = vunpack.c.l.b16 %v307
    %v1250 = vunpack.c.h.b16 %v307
    %v1251 = vunpack.c.l.b16 %v308
    %v1252 = vunpack.c.h.b16 %v308
    %v1253 = vunpack.c.l.b16 %v309
    %v1254 = vunpack.c.h.b16 %v309
    %v1255 = vunpack.c.l.b16 %v310
    %v1256 = vunpack.c.h.b16 %v310
    %v1257 = vunpack.c.l.b16 %v311
    %v1258 = vunpack.c.h.b16 %v311
    %v1259 = vunpack.c.l.b16 %v312
    %v1260 = vunpack.c.h.b16 %v312
    %v1261 = vunpack.c.l.b16 %v313
    %v1262 = vunpack.c.h.b16 %v313
    %v1263 = vunpack.c.l.b16 %v314
    %v1264 = vunpack.c.h.b16 %v314
    %v1265 = vunpack.c.l.b16 %v315
    %v1266 = vunpack.c.h.b16 %v315
    %v1267 = vunpack.c.l.b16 %v316
    %v1268 = vunpack.c.h.b16 %v316
    %v1269 = vunpack.c.l.b16 %v317
    %v1270 = vunpack.c.h.b16 %v317
    %v1271 = vunpack.c.l.b16 %v318
    %v1272 = vunpack.c.h.b16 %v318
    %v1273 = vunpack.c.l.b16 %v319
    %v1274 = vunpack.c.h.b16 %v319
    %v1275 = vunpack.c.l.b16 %v320
    %v1276 = vunpack.c.h.b16 %v320
    %v1277 = vunpack.c.l.b16 %v321
    %v1278 = vunpack.c.h.b16 %v321
    %v1279 = vunpack.c.l.b16 %v322
    %v1280 = vunpack.c.h.b16 %v322
    %v1281 = vunpack.c.l.b16 %v323
    %v1282 = vunpack.c.h.b16 %v323
    %v1283 = vunpack.c.l.b16 %v324
    %v1284 = vunpack.c.h.b16 %v324
    %v1285 = vunpack.c.l.b16 %v325
    %v1286 = vunpack.c.h.b16 %v325
    %v1287 = vunpack.c.l.b16 %v326
    %v1288 = vunpack.c.h.b16 %v326
    %v1289 = vunpack.c.l.b16 %v327
    %v1290 = vunpack.c.h.b16 %v327
    %v1291 = vunpack.c.l.b16 %v328
    %v1292 = vunpack.c.h.b16 %v328
    %v1293 = vunpack.c.l.b16 %v329
    %v1294 = vunpack.c.h.b16 %v329
    %v1295 = vunpack.c.l.b16 %v330
    %v1296 = vunpack.c.h.b16 %v330
    %v1297 = vunpack.c.l.b16 %v331
    %v1298 = vunpack.c.h.b16 %v331
    %v1299 = vunpack.c.l.b16 %v332
    %v1300 = vunpack.c.h.b16 %v332
    %v1301 = vunpack.c.l.b16 %v333
    %v1302 = vunpack.c.h.b16 %v333
    %v1303 = vunpack.c.l.b16 %v334
    %v1304 = vunpack.c.h.b16 %v334
    %v1305 = vunpack.c.l.b16 %v335
    %v1306 = vunpack.c.h.b16 %v335
    %v1307 = vunpack.c.l.b16 %v336
    %v1308 = vunpack.c.h.b16 %v336
    %v1309 = vunpack.c.l.b16 %v337
    %v1310 = vunpack.c.h.b16 %v337
    %v1311 = vunpack.c.l.b16 %v338
    %v1312 = vunpack.c.h.b16 %v338
    %v1313 = vunpack.c.l.b16 %v339
    %v1314 = vunpack.c.h.b16 %v339
    %v1315 = vunpack.c.l.b16 %v340
    %v1316 = vunpack.c.h.b16 %v340
    %v1317 = vunpack.c.l.b16 %v341
    %v1318 = vunpack.c.h.b16 %v341
    %v1319 = vunpack.c.l.b16 %v342
    %v1320 = vunpack.c.h.b16 %v342
    %v1321 = vunpack.c.l.b16 %v343
    %v1322 = vunpack.c.h.b16 %v343
    %v1323 = vunpack.c.l.b16 %v344
    %v1324 = vunpack.c.h.b16 %v344
    %v1325 = vunpack.c.l.b16 %v345
    %v1326 = vunpack.c.h.b16 %v345
    %v1327 = vunpack.c.l.b16 %v346
    %v1328 = vunpack.c.h.b16 %v346
    %v1329 = vunpack.c.l.b16 %v347
    %v1330 = vunpack.c.h.b16 %v347
    %v1331 = vunpack.c.l.b16 %v348
    %v1332 = vunpack.c.h.b16 %v348
    %v1333 = vunpack.c.l.b16 %v349
    %v1334 = vunpack.c.h.b16 %v349
    %v1335 = vunpack.c.l.b16 %v350
    %v1336 = vunpack.c.h.b16 %v350
    %v1337 = vunpack.c.l.b16 %v351
    %v1338 = vunpack.c.h.b16 %v351
    %v1339 = vunpack.c.l.b16 %v352
    %v1340 = vunpack.c.h.b16 %v352
    %v1341 = vunpack.c.l.b16 %v353
    %v1342 = vunpack.c.h.b16 %v353
    %v1343 = vunpack.c.l.b16 %v354
    %v1344 = vunpack.c.h.b16 %v354
    %v1345 = vunpack.c.l.b16 %v355
    %v1346 = vunpack.c.h.b16 %v355
    %v1347 = vunpack.c.l.b16 %v356
    %v1348 = vunpack.c.h.b16 %v356
    %v1349 = vunpack.c.l.b16 %v357
    %v1350 = vunpack.c.h.b16 %v357
    %v1351 = vunpack.c.l.b16 %v358
    %v1352 = vunpack.c.h.b16 %v358
    %v1353 = vunpack.c.l.b16 %v359
    %v1354 = vunpack.c.h.b16 %v359
    %v1355 = vunpack.c.l.b16 %v360
    %v1356 = vunpack.c.h.b16 %v360
    %v1357 = vunpack.c.l.b16 %v361
    %v1358 = vunpack.c.h.b16 %v361
    %v1359 = vunpack.c.l.b16 %v362
    %v1360 = vunpack.c.h.b16 %v362
    %v1361 = vunpack.c.l.b16 %v363
    %v1362 = vunpack.c.h.b16 %v363
    %v1363 = vunpack.c.l.b16 %v364
    %v1364 = vunpack.c.h.b16 %v364
    %v1365 = vunpack.c.l.b16 %v365
    %v1366 = vunpack.c.h.b16 %v365
    %v1367 = vunpack.c.l.b16 %v366
    %v1368 = vunpack.c.h.b16 %v366
    %v1369 = vunpack.c.l.b16 %v367
    %v1370 = vunpack.c.h.b16 %v367
    %v1371 = vunpack.c.l.b16 %v368
    %v1372 = vunpack.c.h.b16 %v368
    %v1373 = vunpack.c.l.b16 %v369
    %v1374 = vunpack.c.h.b16 %v369
    %v1375 = vunpack.c.l.b16 %v370
    %v1376 = vunpack.c.h.b16 %v370
    %v1377 = vunpack.c.l.b16 %v371
    %v1378 = vunpack.c.h.b16 %v371
    %v1379 = vunpack.c.l.b16 %v372
    %v1380 = vunpack.c.h.b16 %v372
    %v1381 = vunpack.c.l.b16 %v373
    %v1382 = vunpack.c.h.b16 %v373
    %v1383 = vunpack.c.l.b16 %v374
    %v1384 = vunpack.c.h.b16 %v374
    %v1385 = vunpack.c.l.b16 %v375
    %v1386 = vunpack.c.h.b16 %v375
    %v1387 = vunpack.c.l.b16 %v376
    %v1388 = vunpack.c.h.b16 %v376
    %v1389 = vunpack.c.l.b16 %v377
    %v1390 = vunpack.c.h.b16 %v377
    %v1391 = vunpack.c.l.b16 %v378
    %v1392 = vunpack.c.h.b16 %v378
    %v1393 = vunpack.c.l.b16 %v379
    %v1394 = vunpack.c.h.b16 %v379
    %v1395 = vunpack.c.l.b16 %v380
    %v1396 = vunpack.c.h.b16 %v380
    %v1397 = vunpack.c.l.b16 %v381
    %v1398 = vunpack.c.h.b16 %v381
    %v1399 = vunpack.c.l.b16 %v382
    %v1400 = vunpack.c.h.b16 %v382
    %v1401 = vunpack.c.l.b16 %v383
    %v1402 = vunpack.c.h.b16 %v383
    %v1403 = vunpack.c.l.b16 %v384
    %v1404 = vunpack.c.h.b16 %v384
    %v1405 = vunpack.c.l.b16 %v385
    %v1406 = vunpack.c.h.b16 %v385
    %v1407 = vunpack.c.l.b16 %v386
    %v1408 = vunpack.c.h.b16 %v386
    %v1409 = vunpack.c.l.b16 %v387
    %v1410 = vunpack.c.h.b16 %v387
    %v1411 = vunpack.c.l.b16 %v388
    %v1412 = vunpack.c.h.b16 %v388
    %v1413 = vunpack.c.l.b16 %v389
    %v1414 = vunpack.c.h.b16 %v389
    %v1415 = vunpack.c.l.b16 %v390
    %v1416 = vunpack.c.h.b16 %v390
    %v1417 = vunpack.c.l.b16 %v391
    %v1418 = vunpack.c.h.b16 %v391
    %v1419 = vunpack.c.l.b16 %v392
    %v1420 = vunpack.c.h.b16 %v392
    %v1421 = vunpack.c.l.b16 %v393
    %v1422 = vunpack.c.h.b16 %v393
    %v1423 = vunpack.c.l.b16 %v394
    %v1424 = vunpack.c.h.b16 %v394
    %v1425 = vunpack.c.l.b16 %v395
    %v1426 = vunpack.c.h.b16 %v395
    %v1427 = vunpack.c.l.b16 %v396
    %v1428 = vunpack.c.h.b16 %v396
    %v1429 = vunpack.c.l.b16 %v397
    %v1430 = vunpack.c.h.b16 %v397
    %v1431 = vunpack.c.l.b16 %v398
    %v1432 = vunpack.c.h.b16 %v398
    %v1433 = vunpack.c.l.b16 %v399
    %v1434 = vunpack.c.h.b16 %v399
    %v1435 = vunpack.c.l.b16 %v400
    %v1436 = vunpack.c.h.b16 %v400
    %v1437 = vunpack.c.l.b16 %v401
    %v1438 = vunpack.c.h.b16 %v401
    %v1439 = vunpack.c.l.b16 %v402
    %v1440 = vunpack.c.h.b16 %v402
    %v1441 = vunpack.c.l.b16 %v403
    %v1442 = vunpack.c.h.b16 %v403
    %v1443 = vunpack.c.l.b16 %v404
    %v1444 = vunpack.c.h.b16 %v404
    %v1445 = vunpack.c.l.b16 %v405
    %v1446 = vunpack.c.h.b16 %v405
    %v1447 = vunpack.c.l.b16 %v406
    %v1448 = vunpack.c.h.b16 %v406
    %v1449 = vunpack.c.l.b16 %v407
    %v1450 = vunpack.c.h.b16 %v407
    %v1451 = vunpack.c.l.b16 %v408
    %v1452 = vunpack.c.h.b16 %v408
    %v1453 = vunpack.c.l.b16 %v409
    %v1454 = vunpack.c.h.b16 %v409
    %v1455 = vunpack.c.l.b16 %v410
    %v1456 = vunpack.c.h.b16 %v410
    %v1457 = vunpack.c.l.b16 %v411
    %v1458 = vunpack.c.h.b16 %v411
    %v1459 = vunpack.c.l.b16 %v412
    %v1460 = vunpack.c.h.b16 %v412
    %v1461 = vunpack.c.l.b16 %v413
    %v1462 = vunpack.c.h.b16 %v413
    %v1463 = vunpack.c.l.b16 %v414
    %v1464 = vunpack.c.h.b16 %v414
    %v1465 = vunpack.c.l.b16 %v415
    %v1466 = vunpack.c.h.b16 %v415
    %v1467 = vunpack.c.l.b16 %v416
    %v1468 = vunpack.c.h.b16 %v416
    %v1469 = vunpack.c.l.b16 %v417
    %v1470 = vunpack.c.h.b16 %v417
    %v1471 = vunpack.c.l.b16 %v418
    %v1472 = vunpack.c.h.b16 %v418
    %v1473 = vunpack.c.l.b16 %v419
    %v1474 = vunpack.c.h.b16 %v419
    %v1475 = vunpack.c.l.b16 %v420
    %v1476 = vunpack.c.h.b16 %v420
    %v1477 = vunpack.c.l.b16 %v421
    %v1478 = vunpack.c.h.b16 %v421
    %v1479 = vunpack.c.l.b16 %v422
    %v1480 = vunpack.c.h.b16 %v422
    %v1481 = vunpack.c.l.b16 %v423
    %v1482 = vunpack.c.h.b16 %v423
    %v1483 = vunpack.c.l.b16 %v424
    %v1484 = vunpack.c.h.b16 %v424
    %v1485 = vunpack.c.l.b16 %v425
    %v1486 = vunpack.c.h.b16 %v425
    %v1487 = vunpack.c.l.b16 %v426
    %v1488 = vunpack.c.h.b16 %v426
    %v1489 = vunpack.c.l.b16 %v427
    %v1490 = vunpack.c.h.b16 %v427
    %v1491 = vunpack.c.l.b16 %v428
    %v1492 = vunpack.c.h.b16 %v428
    %v1493 = vunpack.c.l.b16 %v429
    %v1494 = vunpack.c.h.b16 %v429
    %v1495 = vunpack.c.l.b16 %v430
    %v1496 = vunpack.c.h.b16 %v430
    %v1497 = vunpack.c.l.b16 %v431
    %v1498 = vunpack.c.h.b16 %v431
    %v1499 = vunpack.c.l.b16 %v432
    %v1500 = vunpack.c.h.b16 %v432
    %v1501 = vunpack.c.l.b16 %v433
    %v1502 = vunpack.c.h.b16 %v433
    %v1503 = vunpack.c.l.b16 %v434
    %v1504 = vunpack.c.h.b16 %v434
    %v1505 = vunpack.c.l.b16 %v435
    %v1506 = vunpack.c.h.b16 %v435
    %v1507 = vunpack.c.l.b16 %v436
    %v1508 = vunpack.c.h.b16 %v436
    %v1509 = vunpack.c.l.b16 %v437
    %v1510 = vunpack.c.h.b16 %v437
    %v1511 = vunpack.c.l.b16 %v438
    %v1512 = vunpack.c.h.b16 %v438
    %v1513 = vunpack.c.l.b16 %v439
    %v1514 = vunpack.c.h.b16 %v439
    %v1515 = vunpack.c.l.b16 %v440
    %v1516 = vunpack.c.h.b16 %v440
    %v1517 = vunpack.c.l.b16 %v441
    %v1518 = vunpack.c.h.b16 %v441
    %v1519 = vunpack.c.l.b16 %v442
    %v1520 = vunpack.c.h.b16 %v442
    %v1521 = vunpack.c.l.b16 %v443
    %v1522 = vunpack.c.h.b16 %v443
    %v1523 = vunpack.c.l.b16 %v444
    %v1524 = vunpack.c.h.b16 %v444
    %v1525 = vunpack.c.l.b16 %v445
    %v1526 = vunpack.c.h.b16 %v445
    %v1527 = vunpack.c.l.b16 %v446
    %v1528 = vunpack.c.h.b16 %v446
    %v1529 = vunpack.c.l.b16 %v447
    %v1530 = vunpack.c.h.b16 %v447
    %v1531 = vunpack.c.l.b16 %v448
    %v1532 = vunpack.c.h.b16 %v448
    %v1533 = vunpack.c.l.b16 %v449
    %v1534 = vunpack.c.h.b16 %v449
    %v1535 = vunpack.c.l.b16 %v450
    %v1536 = vunpack.c.h.b16 %v450
    %v1537 = vunpack.c.l.b16 %v451
    %v1538 = vunpack.c.h.b16 %v451
    %v1539 = vunpack.c.l.b16 %v452
    %v1540 = vunpack.c.h.b16 %v452
    %v1541 = vunpack.c.l.b16 %v453
    %v1542 = vunpack.c.h.b16 %v453
    %v1543 = vunpack.c.l.b16 %v454
    %v1544 = vunpack.c.h.b16 %v454
    %v1545 = vunpack.c.l.b16 %v455
    %v1546 = vunpack.c.h.b16 %v455
    %v1547 = vunpack.c.l.b16 %v456
    %v1548 = vunpack.c.h.b16 %v456
    %v1549 = vunpack.c.l.b16 %v457
    %v1550 = vunpack.c.h.b16 %v457
    %v1551 = vunpack.c.l.b16 %v458
    %v1552 = vunpack.c.h.b16 %v458
    %v1553 = vunpack.c.l.b16 %v459
    %v1554 = vunpack.c.h.b16 %v459
    %v1555 = vunpack.c.l.b16 %v460
    %v1556 = vunpack.c.h.b16 %v460
    %v1557 = vunpack.c.l.b16 %v461
    %v1558 = vunpack.c.h.b16 %v461
    %v1559 = vunpack.c.l.b16 %v462
    %v1560 = vunpack.c.h.b16 %v462
    %v1561 = vunpack.c.l.b16 %v463
    %v1562 = vunpack.c.h.b16 %v463
    %v1563 = vunpack.c.l.b16 %v464
    %v1564 = vunpack.c.h.b16 %v464
    %v1565 = vunpack.c.l.b16 %v465
    %v1566 = vunpack.c.h.b16 %v465
    %v1567 = vunpack.c.l.b16 %v466
    %v1568 = vunpack.c.h.b16 %v466
    %v1569 = vunpack.c.l.b16 %v467
    %v1570 = vunpack.c.h.b16 %v467
    %v1571 = vunpack.c.l.b16 %v468
    %v1572 = vunpack.c.h.b16 %v468
    %v1573 = vunpack.c.l.b16 %v469
    %v1574 = vunpack.c.h.b16 %v469
    %v1575 = vunpack.c.l.b16 %v470
    %v1576 = vunpack.c.h.b16 %v470
    %v1577 = vunpack.c.l.b16 %v471
    %v1578 = vunpack.c.h.b16 %v471
    %v1579 = vunpack.c.l.b16 %v472
    %v1580 = vunpack.c.h.b16 %v472
    %v1581 = vunpack.c.l.b16 %v473
    %v1582 = vunpack.c.h.b16 %v473
    %v1583 = vunpack.c.l.b16 %v474
    %v1584 = vunpack.c.h.b16 %v474
    %v1585 = vunpack.c.l.b16 %v475
    %v1586 = vunpack.c.h.b16 %v475
    %v1587 = vunpack.c.l.b16 %v476
    %v1588 = vunpack.c.h.b16 %v476
    %v1589 = vunpack.c.l.b16 %v477
    %v1590 = vunpack.c.h.b16 %v477
    %v1591 = vunpack.c.l.b16 %v478
    %v1592 = vunpack.c.h.b16 %v478
    %v1593 = vunpack.c.l.b16 %v479
    %v1594 = vunpack.c.h.b16 %v479
    %v1595 = vunpack.c.l.b16 %v480
    %v1596 = vunpack.c.h.b16 %v480
    %v1597 = vunpack.c.l.b16 %v481
    %v1598 = vunpack.c.h.b16 %v481
    %v1599 = vunpack.c.l.b16 %v482
    %v1600 = vunpack.c.h.b16 %v482
    %v1601 = vunpack.c.l.b16 %v483
    %v1602 = vunpack.c.h.b16 %v483
    %v1603 = vunpack.c.l.b16 %v484
    %v1604 = vunpack.c.h.b16 %v484
    %v1605 = vunpack.c.l.b16 %v485
    %v1606 = vunpack.c.h.b16 %v485
    %v1607 = vunpack.c.l.b16 %v486
    %v1608 = vunpack.c.h.b16 %v486
    %v1609 = vunpack.c.l.b16 %v487
    %v1610 = vunpack.c.h.b16 %v487
    %v1611 = vunpack.c.l.b16 %v488
    %v1612 = vunpack.c.h.b16 %v488
    %v1613 = vunpack.c.l.b16 %v489
    %v1614 = vunpack.c.h.b16 %v489
    %v1615 = vunpack.c.l.b16 %v490
    %v1616 = vunpack.c.h.b16 %v490
    %v1617 = vunpack.c.l.b16 %v491
    %v1618 = vunpack.c.h.b16 %v491
    %v1619 = vunpack.c.l.b16 %v492
    %v1620 = vunpack.c.h.b16 %v492
    %v1621 = vunpack.c.l.b16 %v493
    %v1622 = vunpack.c.h.b16 %v493
    %v1623 = vunpack.c.l.b16 %v494
    %v1624 = vunpack.c.h.b16 %v494
    %v1625 = vunpack.c.l.b16 %v495
    %v1626 = vunpack.c.h.b16 %v495
    %v1627 = vunpack.c.l.b16 %v496
    %v1628 = vunpack.c.h.b16 %v496
    %v1629 = vunpack.c.l.b16 %v497
    %v1630 = vunpack.c.h.b16 %v497
    %v1631 = vunpack.c.l.b16 %v498
    %v1632 = vunpack.c.h.b16 %v498
    %v1633 = vunpack.c.l.b16 %v499
    %v1634 = vunpack.c.h.b16 %v499
    %v1635 = vunpack.c.l.b16 %v500
    %v1636 = vunpack.c.h.b16 %v500
    %v1637 = vunpack.c.l.b16 %v501
    %v1638 = vunpack.c.h.b16 %v501
    %v1639 = vunpack.c.l.b16 %v502
    %v1640 = vunpack.c.h.b16 %v502
    %v1641 = vunpack.c.l.b16 %v503
    %v1642 = vunpack.c.h.b16 %v503
    %v1643 = vunpack.c.l.b16 %v504
    %v1644 = vunpack.c.h.b16 %v504
    %v1645 = vunpack.c.l.b16 %v505
    %v1646 = vunpack.c.h.b16 %v505
    %v1647 = vunpack.c.l.b16 %v506
    %v1648 = vunpack.c.h.b16 %v506
    %v1649 = vunpack.c.l.b16 %v507
    %v1650 = vunpack.c.h.b16 %v507
    %v1651 = vunpack.c.l.b16 %v508
    %v1652 = vunpack.c.h.b16 %v508
    %v1653 = vunpack.c.l.b16 %v509
    %v1654 = vunpack.c.h.b16 %v509
    %v1655 = vunpack.c.l.b16 %v510
    %v1656 = vunpack.c.h.b16 %v510
    %v1657 = vunpack.c.l.b16 %v511
    %v1658 = vunpack.c.h.b16 %v511
    %v1659 = vunpack.c.l.b16 %v512
    %v1660 = vunpack.c.h.b16 %v512
    %v1661 = vunpack.c.l.b16 %v513
    %v1662 = vunpack.c.h.b16 %v513
    %v1663 = vunpack.c.l.b16 %v514
    %v1664 = vunpack.c.h.b16 %v514
    %v1665 = vunpack.c.l.b16 %v515
    %v1666 = vunpack.c.h.b16 %v515
    %v1667 = vunpack.c.l.b16 %v516
    %v1668 = vunpack.c.h.b16 %v516
    %v1669 = vpack.c.b16 %v909, %v901
    %v1670 = vpack.c.b16 %v910, %v902
    %v1671 = vpack.c.b16 %v911, %v903
    %v1672 = vpack.c.b16 %v912, %v904
    %v1673 = vpack.c.b16 %v913, %v905
    %v1674 = vpack.c.b16 %v914, %v906
    %v1675 = vpack.c.b16 %v915, %v907
    %v1676 = vpack.c.b16 %v916, %v908
    %v1677 = vpack.c.b16 %v925, %v917
    %v1678 = vpack.c.b16 %v926, %v918
    %v1679 = vpack.c.b16 %v927, %v919
    %v1680 = vpack.c.b16 %v928, %v920
    %v1681 = vpack.c.b16 %v929, %v921
    %v1682 = vpack.c.b16 %v930, %v922
    %v1683 = vpack.c.b16 %v931, %v923
    %v1684 = vpack.c.b16 %v932, %v924
    %v1685 = vpack.c.b16 %v941, %v933
    %v1686 = vpack.c.b16 %v942, %v934
    %v1687 = vpack.c.b16 %v943, %v935
    %v1688 = vpack.c.b16 %v944, %v936
    %v1689 = vpack.c.b16 %v945, %v937
    %v1690 = vpack.c.b16 %v946, %v938
    %v1691 = vpack.c.b16 %v947, %v939
    %v1692 = vpack.c.b16 %v948, %v940
    %v1693 = vpack.c.b16 %v957, %v949
    %v1694 = vpack.c.b16 %v958, %v950
    %v1695 = vpack.c.b16 %v959, %v951
    %v1696 = vpack.c.b16 %v960, %v952
    %v1697 = vpack.c.b16 %v961, %v953
    %v1698 = vpack.c.b16 %v962, %v954
    %v1699 = vpack.c.b16 %v963, %v955
    %v1700 = vpack.c.b16 %v964, %v956
    %v1701 = vpack.c.b16 %v973, %v965
    %v1702 = vpack.c.b16 %v974, %v966
    %v1703 = vpack.c.b16 %v975, %v967
    %v1704 = vpack.c.b16 %v976, %v968
    %v1705 = vpack.c.b16 %v977, %v969
    %v1706 = vpack.c.b16 %v978, %v970
    %v1707 = vpack.c.b16 %v979, %v971
    %v1708 = vpack.c.b16 %v980, %v972
    %v1709 = vpack.c.b16 %v989, %v981
    %v1710 = vpack.c.b16 %v990, %v982
    %v1711 = vpack.c.b16 %v991, %v983
    %v1712 = vpack.c.b16 %v992, %v984
    %v1713 = vpack.c.b16 %v993, %v985
    %v1714 = vpack.c.b16 %v994, %v986
    %v1715 = vpack.c.b16 %v995, %v987
    %v1716 = vpack.c.b16 %v996, %v988
    %v1717 = vpack.c.b16 %v1005, %v997
    %v1718 = vpack.c.b16 %v1006, %v998
    %v1719 = vpack.c.b16 %v1007, %v999
    %v1720 = vpack.c.b16 %v1008, %v1000
    %v1721 = vpack.c.b16 %v1009, %v1001
    %v1722 = vpack.c.b16 %v1010, %v1002
    %v1723 = vpack.c.b16 %v1011, %v1003
    %v1724 = vpack.c.b16 %v1012, %v1004
    %v1725 = vpack.c.b16 %v1021, %v1013
    %v1726 = vpack.c.b16 %v1022, %v1014
    %v1727 = vpack.c.b16 %v1023, %v1015
    %v1728 = vpack.c.b16 %v1024, %v1016
    %v1729 = vpack.c.b16 %v1025, %v1017
    %v1730 = vpack.c.b16 %v1026, %v1018
    %v1731 = vpack.c.b16 %v1027, %v1019
    %v1732 = vpack.c.b16 %v1028, %v1020
    %v1733 = vpack.c.b16 %v1037, %v1029
    %v1734 = vpack.c.b16 %v1038, %v1030
    %v1735 = vpack.c.b16 %v1039, %v1031
    %v1736 = vpack.c.b16 %v1040, %v1032
    %v1737 = vpack.c.b16 %v1041, %v1033
    %v1738 = vpack.c.b16 %v1042, %v1034
    %v1739 = vpack.c.b16 %v1043, %v1035
    %v1740 = vpack.c.b16 %v1044, %v1036
    %v1741 = vpack.c.b16 %v1053, %v1045
    %v1742 = vpack.c.b16 %v1054, %v1046
    %v1743 = vpack.c.b16 %v1055, %v1047
    %v1744 = vpack.c.b16 %v1056, %v1048
    %v1745 = vpack.c.b16 %v1057, %v1049
    %v1746 = vpack.c.b16 %v1058, %v1050
    %v1747 = vpack.c.b16 %v1059, %v1051
    %v1748 = vpack.c.b16 %v1060, %v1052
    %v1749 = vpack.c.b16 %v1069, %v1061
    %v1750 = vpack.c.b16 %v1070, %v1062
    %v1751 = vpack.c.b16 %v1071, %v1063
    %v1752 = vpack.c.b16 %v1072, %v1064
    %v1753 = vpack.c.b16 %v1073, %v1065
    %v1754 = vpack.c.b16 %v1074, %v1066
    %v1755 = vpack.c.b16 %v1075, %v1067
    %v1756 = vpack.c.b16 %v1076, %v1068
    %v1757 = vpack.c.b16 %v1085, %v1077
    %v1758 = vpack.c.b16 %v1086, %v1078
    %v1759 = vpack.c.b16 %v1087, %v1079
    %v1760 = vpack.c.b16 %v1088, %v1080
    %v1761 = vpack.c.b16 %v1089, %v1081
    %v1762 = vpack.c.b16 %v1090, %v1082
    %v1763 = vpack.c.b16 %v1091, %v1083
    %v1764 = vpack.c.b16 %v1092, %v1084
    %v1765 = vpack.c.b16 %v1101, %v1093
    %v1766 = vpack.c.b16 %v1102, %v1094
    %v1767 = vpack.c.b16 %v1103, %v1095
    %v1768 = vpack.c.b16 %v1104, %v1096
    %v1769 = vpack.c.b16 %v1105, %v1097
    %v1770 = vpack.c.b16 %v1106, %v1098
    %v1771 = vpack.c.b16 %v1107, %v1099
    %v1772 = vpack.c.b16 %v1108, %v1100
    %v1773 = vpack.c.b16 %v1117, %v1109
    %v1774 = vpack.c.b16 %v1118, %v1110
    %v1775 = vpack.c.b16 %v1119, %v1111
    %v1776 = vpack.c.b16 %v1120, %v1112
    %v1777 = vpack.c.b16 %v1121, %v1113
    %v1778 = vpack.c.b16 %v1122, %v1114
    %v1779 = vpack.c.b16 %v1123, %v1115
    %v1780 = vpack.c.b16 %v1124, %v1116
    %v1781 = vpack.c.b16 %v1133, %v1125
    %v1782 = vpack.c.b16 %v1134, %v1126
    %v1783 = vpack.c.b16 %v1135, %v1127
    %v1784 = vpack.c.b16 %v1136, %v1128
    %v1785 = vpack.c.b16 %v1137, %v1129
    %v1786 = vpack.c.b16 %v1138, %v1130
    %v1787 = vpack.c.b16 %v1139, %v1131
    %v1788 = vpack.c.b16 %v1140, %v1132
    %v1789 = vpack.c.b16 %v1149, %v1141
    %v1790 = vpack.c.b16 %v1150, %v1142
    %v1791 = vpack.c.b16 %v1151, %v1143
    %v1792 = vpack.c.b16 %v1152, %v1144
    %v1793 = vpack.c.b16 %v1153, %v1145
    %v1794 = vpack.c.b16 %v1154, %v1146
    %v1795 = vpack.c.b16 %v1155, %v1147
    %v1796 = vpack.c.b16 %v1156, %v1148
    %v1797 = vpack.c.b16 %v1165, %v1157
    %v1798 = vpack.c.b16 %v1166, %v1158
    %v1799 = vpack.c.b16 %v1167, %v1159
    %v1800 = vpack.c.b16 %v1168, %v1160
    %v1801 = vpack.c.b16 %v1169, %v1161
    %v1802 = vpack.c.b16 %v1170, %v1162
    %v1803 = vpack.c.b16 %v1171, %v1163
    %v1804 = vpack.c.b16 %v1172, %v1164
    %v1805 = vpack.c.b16 %v1181, %v1173
    %v1806 = vpack.c.b16 %v1182, %v1174
    %v1807 = vpack.c.b16 %v1183, %v1175
    %v1808 = vpack.c.b16 %v1184, %v1176
    %v1809 = vpack.c.b16 %v1185, %v1177
    %v1810 = vpack.c.b16 %v1186, %v1178
    %v1811 = vpack.c.b16 %v1187, %v1179
    %v1812 = vpack.c.b16 %v1188, %v1180
    %v1813 = vpack.c.b16 %v1197, %v1189
    %v1814 = vpack.c.b16 %v1198, %v1190
    %v1815 = vpack.c.b16 %v1199, %v1191
    %v1816 = vpack.c.b16 %v1200, %v1192
    %v1817 = vpack.c.b16 %v1201, %v1193
    %v1818 = vpack.c.b16 %v1202, %v1194
    %v1819 = vpack.c.b16 %v1203, %v1195
    %v1820 = vpack.c.b16 %v1204, %v1196
    %v1821 = vpack.c.b16 %v1213, %v1205
    %v1822 = vpack.c.b16 %v1214, %v1206
    %v1823 = vpack.c.b16 %v1215, %v1207
    %v1824 = vpack.c.b16 %v1216, %v1208
    %v1825 = vpack.c.b16 %v1217, %v1209
    %v1826 = vpack.c.b16 %v1218, %v1210
    %v1827 = vpack.c.b16 %v1219, %v1211
    %v1828 = vpack.c.b16 %v1220, %v1212
    %v1829 = vpack.c.b16 %v1229, %v1221
    %v1830 = vpack.c.b16 %v1230, %v1222
    %v1831 = vpack.c.b16 %v1231, %v1223
    %v1832 = vpack.c.b16 %v1232, %v1224
    %v1833 = vpack.c.b16 %v1233, %v1225
    %v1834 = vpack.c.b16 %v1234, %v1226
    %v1835 = vpack.c.b16 %v1235, %v1227
    %v1836 = vpack.c.b16 %v1236, %v1228
    %v1837 = vpack.c.b16 %v1245, %v1237
    %v1838 = vpack.c.b16 %v1246, %v1238
    %v1839 = vpack.c.b16 %v1247, %v1239
    %v1840 = vpack.c.b16 %v1248, %v1240
    %v1841 = vpack.c.b16 %v1249, %v1241
    %v1842 = vpack.c.b16 %v1250, %v1242
    %v1843 = vpack.c.b16 %v1251, %v1243
    %v1844 = vpack.c.b16 %v1252, %v1244
    %v1845 = vpack.c.b16 %v1261, %v1253
    %v1846 = vpack.c.b16 %v1262, %v1254
    %v1847 = vpack.c.b16 %v1263, %v1255
    %v1848 = vpack.c.b16 %v1264, %v1256
    %v1849 = vpack.c.b16 %v1265, %v1257
    %v1850 = vpack.c.b16 %v1266, %v1258
    %v1851 = vpack.c.b16 %v1267, %v1259
    %v1852 = vpack.c.b16 %v1268, %v1260
    %v1853 = vpack.c.b16 %v1277, %v1269
    %v1854 = vpack.c.b16 %v1278, %v1270
    %v1855 = vpack.c.b16 %v1279, %v1271
    %v1856 = vpack.c.b16 %v1280, %v1272
    %v1857 = vpack.c.b16 %v1281, %v1273
    %v1858 = vpack.c.b16 %v1282, %v1274
    %v1859 = vpack.c.b16 %v1283, %v1275
    %v1860 = vpack.c.b16 %v1284, %v1276
    %v1861 = vpack.c.b16 %v1293, %v1285
    %v1862 = vpack.c.b16 %v1294, %v1286
    %v1863 = vpack.c.b16 %v1295, %v1287
    %v1864 = vpack.c.b16 %v1296, %v1288
    %v1865 = vpack.c.b16 %v1297, %v1289
    %v1866 = vpack.c.b16 %v1298, %v1290
    %v1867 = vpack.c.b16 %v1299, %v1291
    %v1868 = vpack.c.b16 %v1300, %v1292
    %v1869 = vpack.c.b16 %v1309, %v1301
    %v1870 = vpack.c.b16 %v1310, %v1302
    %v1871 = vpack.c.b16 %v1311, %v1303
    %v1872 = vpack.c.b16 %v1312, %v1304
    %v1873 = vpack.c.b16 %v1313, %v1305
    %v1874 = vpack.c.b16 %v1314, %v1306
    %v1875 = vpack.c.b16 %v1315, %v1307
    %v1876 = vpack.c.b16 %v1316, %v1308
    %v1877 = vpack.c.b16 %v1325, %v1317
    %v1878 = vpack.c.b16 %v1326, %v1318
    %v1879 = vpack.c.b16 %v1327, %v1319
    %v1880 = vpack.c.b16 %v1328, %v1320
    %v1881 = vpack.c.b16 %v1329, %v1321
    %v1882 = vpack.c.b16 %v1330, %v1322
    %v1883 = vpack.c.b16 %v1331, %v1323
    %v1884 = vpack.c.b16 %v1332, %v1324
    %v1885 = vpack.c.b16 %v1341, %v1333
    %v1886 = vpack.c.b16 %v1342, %v1334
    %v1887 = vpack.c.b16 %v1343, %v1335
    %v1888 = vpack.c.b16 %v1344, %v1336
    %v1889 = vpack.c.b16 %v1345, %v1337
    %v1890 = vpack.c.b16 %v1346, %v1338
    %v1891 = vpack.c.b16 %v1347, %v1339
    %v1892 = vpack.c.b16 %v1348, %v1340
    %v1893 = vpack.c.b16 %v1357, %v1349
    %v1894 = vpack.c.b16 %v1358, %v1350
    %v1895 = vpack.c.b16 %v1359, %v1351
    %v1896 = vpack.c.b16 %v1360, %v1352
    %v1897 = vpack.c.b16 %v1361, %v1353
    %v1898 = vpack.c.b16 %v1362, %v1354
    %v1899 = vpack.c.b16 %v1363, %v1355
    %v1900 = vpack.c.b16 %v1364, %v1356
    %v1901 = vpack.c.b16 %v1373, %v1365
    %v1902 = vpack.c.b16 %v1374, %v1366
    %v1903 = vpack.c.b16 %v1375, %v1367
    %v1904 = vpack.c.b16 %v1376, %v1368
    %v1905 = vpack.c.b16 %v1377, %v1369
    %v1906 = vpack.c.b16 %v1378, %v1370
    %v1907 = vpack.c.b16 %v1379, %v1371
    %v1908 = vpack.c.b16 %v1380, %v1372
    %v1909 = vpack.c.b16 %v1389, %v1381
    %v1910 = vpack.c.b16 %v1390, %v1382
    %v1911 = vpack.c.b16 %v1391, %v1383
    %v1912 = vpack.c.b16 %v1392, %v1384
    %v1913 = vpack.c.b16 %v1393, %v1385
    %v1914 = vpack.c.b16 %v1394, %v1386
    %v1915 = vpack.c.b16 %v1395, %v1387
    %v1916 = vpack.c.b16 %v1396, %v1388
    %v1917 = vpack.c.b16 %v1405, %v1397
    %v1918 = vpack.c.b16 %v1406, %v1398
    %v1919 = vpack.c.b16 %v1407, %v1399
    %v1920 = vpack.c.b16 %v1408, %v1400
    %v1921 = vpack.c.b16 %v1409, %v1401
    %v1922 = vpack.c.b16 %v1410, %v1402
    %v1923 = vpack.c.b16 %v1411, %v1403
    %v1924 = vpack.c.b16 %v1412, %v1404
    %v1925 = vpack.c.b16 %v1421, %v1413
    %v1926 = vpack.c.b16 %v1422, %v1414
    %v1927 = vpack.c.b16 %v1423, %v1415
    %v1928 = vpack.c.b16 %v1424, %v1416
    %v1929 = vpack.c.b16 %v1425, %v1417
    %v1930 = vpack.c.b16 %v1426, %v1418
    %v1931 = vpack.c.b16 %v1427, %v1419
    %v1932 = vpack.c.b16 %v1428, %v1420
    %v1933 = vpack.c.b16 %v1437, %v1429
    %v1934 = vpack.c.b16 %v1438, %v1430
    %v1935 = vpack.c.b16 %v1439, %v1431
    %v1936 = vpack.c.b16 %v1440, %v1432
    %v1937 = vpack.c.b16 %v1441, %v1433
    %v1938 = vpack.c.b16 %v1442, %v1434
    %v1939 = vpack.c.b16 %v1443, %v1435
    %v1940 = vpack.c.b16 %v1444, %v1436
    %v1941 = vpack.c.b16 %v1453, %v1445
    %v1942 = vpack.c.b16 %v1454, %v1446
    %v1943 = vpack.c.b16 %v1455, %v1447
    %v1944 = vpack.c.b16 %v1456, %v1448
    %v1945 = vpack.c.b16 %v1457, %v1449
    %v1946 = vpack.c.b16 %v1458, %v1450
    %v1947 = vpack.c.b16 %v1459, %v1451
    %v1948 = vpack.c.b16 %v1460, %v1452
    %v1949 = vpack.c.b16 %v1469, %v1461
    %v1950 = vpack.c.b16 %v1470, %v1462
    %v1951 = vpack.c.b16 %v1471, %v1463
    %v1952 = vpack.c.b16 %v1472, %v1464
    %v1953 = vpack.c.b16 %v1473, %v1465
    %v1954 = vpack.c.b16 %v1474, %v1466
    %v1955 = vpack.c.b16 %v1475, %v1467
    %v1956 = vpack.c.b16 %v1476, %v1468
    %v1957 = vpack.c.b16 %v1485, %v1477
    %v1958 = vpack.c.b16 %v1486, %v1478
    %v1959 = vpack.c.b16 %v1487, %v1479
    %v1960 = vpack.c.b16 %v1488, %v1480
    %v1961 = vpack.c.b16 %v1489, %v1481
    %v1962 = vpack.c.b16 %v1490, %v1482
    %v1963 = vpack.c.b16 %v1491, %v1483
    %v1964 = vpack.c.b16 %v1492, %v1484
    %v1965 = vpack.c.b16 %v1501, %v1493
    %v1966 = vpack.c.b16 %v1502, %v1494
    %v1967 = vpack.c.b16 %v1503, %v1495
    %v1968 = vpack.c.b16 %v1504, %v1496
    %v1969 = vpack.c.b16 %v1505, %v1497
    %v1970 = vpack.c.b16 %v1506, %v1498
    %v1971 = vpack.c.b16 %v1507, %v1499
    %v1972 = vpack.c.b16 %v1508, %v1500
    %v1973 = vpack.c.b16 %v1517, %v1509
    %v1974 = vpack.c.b16 %v1518, %v1510
    %v1975 = vpack.c.b16 %v1519, %v1511
    %v1976 = vpack.c.b16 %v1520, %v1512
    %v1977 = vpack.c.b16 %v1521, %v1513
    %v1978 = vpack.c.b16 %v1522, %v1514
    %v1979 = vpack.c.b16 %v1523, %v1515
    %v1980 = vpack.c.b16 %v1524, %v1516
    %v1981 = vpack.c.b16 %v1533, %v1525
    %v1982 = vpack.c.b16 %v1534, %v1526
    %v1983 = vpack.c.b16 %v1535, %v1527
    %v1984 = vpack.c.b16 %v1536, %v1528
    %v1985 = vpack.c.b16 %v1537, %v1529
    %v1986 = vpack.c.b16 %v1538, %v1530
    %v1987 = vpack.c.b16 %v1539, %v1531
    %v1988 = vpack.c.b16 %v1540, %v1532
    %v1989 = vpack.c.b16 %v1549, %v1541
    %v1990 = vpack.c.b16 %v1550, %v1542
    %v1991 = vpack.c.b16 %v1551, %v1543
    %v1992 = vpack.c.b16 %v1552, %v1544
    %v1993 = vpack.c.b16 %v1553, %v1545
    %v1994 = vpack.c.b16 %v1554, %v1546
    %v1995 = vpack.c.b16 %v1555, %v1547
    %v1996 = vpack.c.b16 %v1556, %v1548
    %v1997 = vpack.c.b16 %v1565, %v1557
    %v1998 = vpack.c.b16 %v1566, %v1558
    %v1999 = vpack.c.b16 %v1567, %v1559
    %v2000 = vpack.c.b16 %v1568, %v1560
    %v2001 = vpack.c.b16 %v1569, %v1561
    %v2002 = vpack.c.b16 %v1570, %v1562
    %v2003 = vpack.c.b16 %v1571, %v1563
    %v2004 = vpack.c.b16 %v1572, %v1564
    %v2005 = vpack.c.b16 %v1581, %v1573
    %v2006 = vpack.c.b16 %v1582, %v1574
    %v2007 = vpack.c.b16 %v1583, %v1575
    %v2008 = vpack.c.b16 %v1584, %v1576
    %v2009 = vpack.c.b16 %v1585, %v1577
    %v2010 = vpack.c.b16 %v1586, %v1578
    %v2011 = vpack.c.b16 %v1587, %v1579
    %v2012 = vpack.c.b16 %v1588, %v1580
    %v2013 = vpack.c.b16 %v1597, %v1589
    %v2014 = vpack.c.b16 %v1598, %v1590
    %v2015 = vpack.c.b16 %v1599, %v1591
    %v2016 = vpack.c.b16 %v1600, %v1592
    %v2017 = vpack.c.b16 %v1601, %v1593
    %v2018 = vpack.c.b16 %v1602, %v1594
    %v2019 = vpack.c.b16 %v1603, %v1595
    %v2020 = vpack.c.b16 %v1604, %v1596
    %v2021 = vpack.c.b16 %v1613, %v1605
    %v2022 = vpack.c.b16 %v1614, %v1606
    %v2023 = vpack.c.b16 %v1615, %v1607
    %v2024 = vpack.c.b16 %v1616, %v1608
    %v2025 = vpack.c.b16 %v1617, %v1609
    %v2026 = vpack.c.b16 %v1618, %v1610
    %v2027 = vpack.c.b16 %v1619, %v1611
    %v2028 = vpack.c.b16 %v1620, %v1612
    %v2029 = vpack.c.b16 %v1629, %v1621
    %v2030 = vpack.c.b16 %v1630, %v1622
    %v2031 = vpack.c.b16 %v1631, %v1623
    %v2032 = vpack.c.b16 %v1632, %v1624
    %v2033 = vpack.c.b16 %v1633, %v1625
    %v2034 = vpack.c.b16 %v1634, %v1626
    %v2035 = vpack.c.b16 %v1635, %v1627
    %v2036 = vpack.c.b16 %v1636, %v1628
    %v2037 = vpack.c.b16 %v1645, %v1637
    %v2038 = vpack.c.b16 %v1646, %v1638
    %v2039 = vpack.c.b16 %v1647, %v1639
    %v2040 = vpack.c.b16 %v1648, %v1640
    %v2041 = vpack.c.b16 %v1649, %v1641
    %v2042 = vpack.c.b16 %v1650, %v1642
    %v2043 = vpack.c.b16 %v1651, %v1643
    %v2044 = vpack.c.b16 %v1652, %v1644
    %v2045 = vpack.c.b16 %v1661, %v1653
    %v2046 = vpack.c.b16 %v1662, %v1654
    %v2047 = vpack.c.b16 %v1663, %v1655
    %v2048 = vpack.c.b16 %v1664, %v1656
    %v2049 = vpack.c.b16 %v1665, %v1657
    %v2050 = vpack.c.b16 %v1666, %v1658
    %v2051 = vpack.c.b16 %v1667, %v1659
    %v2052 = vpack.c.b16 %v1668, %v1660
    %2437 = vmatpush.bf16.msra.mxu0 %v1725
    %2438 = vmatpush.bf16.msra.mxu0 %v1717
    %2439 = vmatpush.bf16.msra.mxu0 %v1709
    %2440 = vmatpush.bf16.msra.mxu0 %v1701
    %2441 = vmatpush.bf16.msra.mxu0 %v1693
    %2442 = vmatpush.bf16.msra.mxu0 %v1685
    %2443 = vmatpush.bf16.msra.mxu0 %v1677
    %2444 = vmatpush.bf16.msra.mxu0 %v1669
    %2445 = vmatmul.bf16.gmra.mxu0 %v127
    %v2446 = vpop.f32.mrf.mxu0
    %v2447 = vadd.f32 0.0, %v2446
    %v2448 = vpop.f32.mrf.mxu0
    %v2449 = vadd.f32 0.0, %v2448
    %2450 = vdwg.mxu0
    %2451 = vmatpush.bf16.msra.mxu0 %v1789
    %2452 = vmatpush.bf16.msra.mxu0 %v1781
    %2453 = vmatpush.bf16.msra.mxu0 %v1773
    %2454 = vmatpush.bf16.msra.mxu0 %v1765
    %2455 = vmatpush.bf16.msra.mxu0 %v1757
    %2456 = vmatpush.bf16.msra.mxu0 %v1749
    %2457 = vmatpush.bf16.msra.mxu0 %v1741
    %2458 = vmatpush.bf16.msra.mxu0 %v1733
    %2459 = vmatmul.bf16.gmra.mxu0 %v128
    %v2460 = vpop.f32.mrf.mxu0
    %v2461 = vadd.f32 %v2447, %v2460
    %v2462 = vpop.f32.mrf.mxu0
    %v2463 = vadd.f32 %v2449, %v2462
    %2464 = vdwg.mxu0
    %2465 = vmatpush.bf16.msra.mxu0 %v1853
    %2466 = vmatpush.bf16.msra.mxu0 %v1845
    %2467 = vmatpush.bf16.msra.mxu0 %v1837
    %2468 = vmatpush.bf16.msra.mxu0 %v1829
    %2469 = vmatpush.bf16.msra.mxu0 %v1821
    %2470 = vmatpush.bf16.msra.mxu0 %v1813
    %2471 = vmatpush.bf16.msra.mxu0 %v1805
    %2472 = vmatpush.bf16.msra.mxu0 %v1797
    %2473 = vmatmul.bf16.gmra.mxu0 %v129
    %v2474 = vpop.f32.mrf.mxu0
    %v2475 = vadd.f32 %v2461, %v2474
    %v2476 = vpop.f32.mrf.mxu0
    %v2477 = vadd.f32 %v2463, %v2476
    %2478 = vdwg.mxu0
    %2479 = vmatpush.bf16.msra.mxu0 %v1917
    %2480 = vmatpush.bf16.msra.mxu0 %v1909
    %2481 = vmatpush.bf16.msra.mxu0 %v1901
    %2482 = vmatpush.bf16.msra.mxu0 %v1893
    %2483 = vmatpush.bf16.msra.mxu0 %v1885
    %2484 = vmatpush.bf16.msra.mxu0 %v1877
    %2485 = vmatpush.bf16.msra.mxu0 %v1869
    %2486 = vmatpush.bf16.msra.mxu0 %v1861
    %2487 = vmatmul.bf16.gmra.mxu0 %v130
    %v2488 = vpop.f32.mrf.mxu0
    %v2489 = vadd.f32 %v2475, %v2488
    %v2490 = vpop.f32.mrf.mxu0
    %v2491 = vadd.f32 %v2477, %v2490
    %2492 = vdwg.mxu0
    %2493 = vmatpush.bf16.msra.mxu0 %v1981
    %2494 = vmatpush.bf16.msra.mxu0 %v1973
    %2495 = vmatpush.bf16.msra.mxu0 %v1965
    %2496 = vmatpush.bf16.msra.mxu0 %v1957
    %2497 = vmatpush.bf16.msra.mxu0 %v1949
    %2498 = vmatpush.bf16.msra.mxu0 %v1941
    %2499 = vmatpush.bf16.msra.mxu0 %v1933
    %2500 = vmatpush.bf16.msra.mxu0 %v1925
    %2501 = vmatmul.bf16.gmra.mxu0 %v131
    %v2502 = vpop.f32.mrf.mxu0
    %v2503 = vadd.f32 %v2489, %v2502
    %v2504 = vpop.f32.mrf.mxu0
    %v2505 = vadd.f32 %v2491, %v2504
    %2506 = vdwg.mxu0
    %2507 = vmatpush.bf16.msra.mxu0 %v2045
    %2508 = vmatpush.bf16.msra.mxu0 %v2037
    %2509 = vmatpush.bf16.msra.mxu0 %v2029
    %2510 = vmatpush.bf16.msra.mxu0 %v2021
    %2511 = vmatpush.bf16.msra.mxu0 %v2013
    %2512 = vmatpush.bf16.msra.mxu0 %v2005
    %2513 = vmatpush.bf16.msra.mxu0 %v1997
    %2514 = vmatpush.bf16.msra.mxu0 %v1989
    %2515 = vmatmul.bf16.gmra.mxu0 %v132
    %v2516 = vpop.f32.mrf.mxu0
    %v2517 = vadd.f32 %v2503, %v2516
    %v2518 = vpop.f32.mrf.mxu0
    %v2519 = vadd.f32 %v2505, %v2518
    %2520 = vdwg.mxu0
    %2521 = vmatpush.bf16.msra.mxu0 %v1726
    %2522 = vmatpush.bf16.msra.mxu0 %v1718
    %2523 = vmatpush.bf16.msra.mxu0 %v1710
    %2524 = vmatpush.bf16.msra.mxu0 %v1702
    %2525 = vmatpush.bf16.msra.mxu0 %v1694
    %2526 = vmatpush.bf16.msra.mxu0 %v1686
    %2527 = vmatpush.bf16.msra.mxu0 %v1678
    %2528 = vmatpush.bf16.msra.mxu0 %v1670
    %2529 = vmatmul.bf16.gmra.mxu0 %v127
    %v2530 = vpop.f32.mrf.mxu0
    %v2531 = vadd.f32 0.0, %v2530
    %v2532 = vpop.f32.mrf.mxu0
    %v2533 = vadd.f32 0.0, %v2532
    %2534 = vdwg.mxu0
    %2535 = vmatpush.bf16.msra.mxu0 %v1790
    %2536 = vmatpush.bf16.msra.mxu0 %v1782
    %2537 = vmatpush.bf16.msra.mxu0 %v1774
    %2538 = vmatpush.bf16.msra.mxu0 %v1766
    %2539 = vmatpush.bf16.msra.mxu0 %v1758
    %2540 = vmatpush.bf16.msra.mxu0 %v1750
    %2541 = vmatpush.bf16.msra.mxu0 %v1742
    %2542 = vmatpush.bf16.msra.mxu0 %v1734
    %2543 = vmatmul.bf16.gmra.mxu0 %v128
    %v2544 = vpop.f32.mrf.mxu0
    %v2545 = vadd.f32 %v2531, %v2544
    %v2546 = vpop.f32.mrf.mxu0
    %v2547 = vadd.f32 %v2533, %v2546
    %2548 = vdwg.mxu0
    %2549 = vmatpush.bf16.msra.mxu0 %v1854
    %2550 = vmatpush.bf16.msra.mxu0 %v1846
    %2551 = vmatpush.bf16.msra.mxu0 %v1838
    %2552 = vmatpush.bf16.msra.mxu0 %v1830
    %2553 = vmatpush.bf16.msra.mxu0 %v1822
    %2554 = vmatpush.bf16.msra.mxu0 %v1814
    %2555 = vmatpush.bf16.msra.mxu0 %v1806
    %2556 = vmatpush.bf16.msra.mxu0 %v1798
    %2557 = vmatmul.bf16.gmra.mxu0 %v129
    %v2558 = vpop.f32.mrf.mxu0
    %v2559 = vadd.f32 %v2545, %v2558
    %v2560 = vpop.f32.mrf.mxu0
    %v2561 = vadd.f32 %v2547, %v2560
    %2562 = vdwg.mxu0
    %2563 = vmatpush.bf16.msra.mxu0 %v1918
    %2564 = vmatpush.bf16.msra.mxu0 %v1910
    %2565 = vmatpush.bf16.msra.mxu0 %v1902
    %2566 = vmatpush.bf16.msra.mxu0 %v1894
    %2567 = vmatpush.bf16.msra.mxu0 %v1886
    %2568 = vmatpush.bf16.msra.mxu0 %v1878
    %2569 = vmatpush.bf16.msra.mxu0 %v1870
    %2570 = vmatpush.bf16.msra.mxu0 %v1862
    %2571 = vmatmul.bf16.gmra.mxu0 %v130
    %v2572 = vpop.f32.mrf.mxu0
    %v2573 = vadd.f32 %v2559, %v2572
    %v2574 = vpop.f32.mrf.mxu0
    %v2575 = vadd.f32 %v2561, %v2574
    %2576 = vdwg.mxu0
    %2577 = vmatpush.bf16.msra.mxu0 %v1982
    %2578 = vmatpush.bf16.msra.mxu0 %v1974
    %2579 = vmatpush.bf16.msra.mxu0 %v1966
    %2580 = vmatpush.bf16.msra.mxu0 %v1958
    %2581 = vmatpush.bf16.msra.mxu0 %v1950
    %2582 = vmatpush.bf16.msra.mxu0 %v1942
    %2583 = vmatpush.bf16.msra.mxu0 %v1934
    %2584 = vmatpush.bf16.msra.mxu0 %v1926
    %2585 = vmatmul.bf16.gmra.mxu0 %v131
    %v2586 = vpop.f32.mrf.mxu0
    %v2587 = vadd.f32 %v2573, %v2586
    %v2588 = vpop.f32.mrf.mxu0
    %v2589 = vadd.f32 %v2575, %v2588
    %2590 = vdwg.mxu0
    %2591 = vmatpush.bf16.msra.mxu0 %v2046
    %2592 = vmatpush.bf16.msra.mxu0 %v2038
    %2593 = vmatpush.bf16.msra.mxu0 %v2030
    %2594 = vmatpush.bf16.msra.mxu0 %v2022
    %2595 = vmatpush.bf16.msra.mxu0 %v2014
    %2596 = vmatpush.bf16.msra.mxu0 %v2006
    %2597 = vmatpush.bf16.msra.mxu0 %v1998
    %2598 = vmatpush.bf16.msra.mxu0 %v1990
    %2599 = vmatmul.bf16.gmra.mxu0 %v132
    %v2600 = vpop.f32.mrf.mxu0
    %v2601 = vadd.f32 %v2587, %v2600
    %v2602 = vpop.f32.mrf.mxu0
    %v2603 = vadd.f32 %v2589, %v2602
    %2604 = vdwg.mxu0
    %2605 = vmatpush.bf16.msra.mxu0 %v1727
    %2606 = vmatpush.bf16.msra.mxu0 %v1719
    %2607 = vmatpush.bf16.msra.mxu0 %v1711
    %2608 = vmatpush.bf16.msra.mxu0 %v1703
    %2609 = vmatpush.bf16.msra.mxu0 %v1695
    %2610 = vmatpush.bf16.msra.mxu0 %v1687
    %2611 = vmatpush.bf16.msra.mxu0 %v1679
    %2612 = vmatpush.bf16.msra.mxu0 %v1671
    %2613 = vmatmul.bf16.gmra.mxu0 %v127
    %v2614 = vpop.f32.mrf.mxu0
    %v2615 = vadd.f32 0.0, %v2614
    %v2616 = vpop.f32.mrf.mxu0
    %v2617 = vadd.f32 0.0, %v2616
    %2618 = vdwg.mxu0
    %2619 = vmatpush.bf16.msra.mxu0 %v1791
    %2620 = vmatpush.bf16.msra.mxu0 %v1783
    %2621 = vmatpush.bf16.msra.mxu0 %v1775
    %2622 = vmatpush.bf16.msra.mxu0 %v1767
    %2623 = vmatpush.bf16.msra.mxu0 %v1759
    %2624 = vmatpush.bf16.msra.mxu0 %v1751
    %2625 = vmatpush.bf16.msra.mxu0 %v1743
    %2626 = vmatpush.bf16.msra.mxu0 %v1735
    %2627 = vmatmul.bf16.gmra.mxu0 %v128
    %v2628 = vpop.f32.mrf.mxu0
    %v2629 = vadd.f32 %v2615, %v2628
    %v2630 = vpop.f32.mrf.mxu0
    %v2631 = vadd.f32 %v2617, %v2630
    %2632 = vdwg.mxu0
    %2633 = vmatpush.bf16.msra.mxu0 %v1855
    %2634 = vmatpush.bf16.msra.mxu0 %v1847
    %2635 = vmatpush.bf16.msra.mxu0 %v1839
    %2636 = vmatpush.bf16.msra.mxu0 %v1831
    %2637 = vmatpush.bf16.msra.mxu0 %v1823
    %2638 = vmatpush.bf16.msra.mxu0 %v1815
    %2639 = vmatpush.bf16.msra.mxu0 %v1807
    %2640 = vmatpush.bf16.msra.mxu0 %v1799
    %2641 = vmatmul.bf16.gmra.mxu0 %v129
    %v2642 = vpop.f32.mrf.mxu0
    %v2643 = vadd.f32 %v2629, %v2642
    %v2644 = vpop.f32.mrf.mxu0
    %v2645 = vadd.f32 %v2631, %v2644
    %2646 = vdwg.mxu0
    %2647 = vmatpush.bf16.msra.mxu0 %v1919
    %2648 = vmatpush.bf16.msra.mxu0 %v1911
    %2649 = vmatpush.bf16.msra.mxu0 %v1903
    %2650 = vmatpush.bf16.msra.mxu0 %v1895
    %2651 = vmatpush.bf16.msra.mxu0 %v1887
    %2652 = vmatpush.bf16.msra.mxu0 %v1879
    %2653 = vmatpush.bf16.msra.mxu0 %v1871
    %2654 = vmatpush.bf16.msra.mxu0 %v1863
    %2655 = vmatmul.bf16.gmra.mxu0 %v130
    %v2656 = vpop.f32.mrf.mxu0
    %v2657 = vadd.f32 %v2643, %v2656
    %v2658 = vpop.f32.mrf.mxu0
    %v2659 = vadd.f32 %v2645, %v2658
    %2660 = vdwg.mxu0
    %2661 = vmatpush.bf16.msra.mxu0 %v1983
    %2662 = vmatpush.bf16.msra.mxu0 %v1975
    %2663 = vmatpush.bf16.msra.mxu0 %v1967
    %2664 = vmatpush.bf16.msra.mxu0 %v1959
    %2665 = vmatpush.bf16.msra.mxu0 %v1951
    %2666 = vmatpush.bf16.msra.mxu0 %v1943
    %2667 = vmatpush.bf16.msra.mxu0 %v1935
    %2668 = vmatpush.bf16.msra.mxu0 %v1927
    %2669 = vmatmul.bf16.gmra.mxu0 %v131
    %v2670 = vpop.f32.mrf.mxu0
    %v2671 = vadd.f32 %v2657, %v2670
    %v2672 = vpop.f32.mrf.mxu0
    %v2673 = vadd.f32 %v2659, %v2672
    %2674 = vdwg.mxu0
    %2675 = vmatpush.bf16.msra.mxu0 %v2047
    %2676 = vmatpush.bf16.msra.mxu0 %v2039
    %2677 = vmatpush.bf16.msra.mxu0 %v2031
    %2678 = vmatpush.bf16.msra.mxu0 %v2023
    %2679 = vmatpush.bf16.msra.mxu0 %v2015
    %2680 = vmatpush.bf16.msra.mxu0 %v2007
    %2681 = vmatpush.bf16.msra.mxu0 %v1999
    %2682 = vmatpush.bf16.msra.mxu0 %v1991
    %2683 = vmatmul.bf16.gmra.mxu0 %v132
    %v2684 = vpop.f32.mrf.mxu0
    %v2685 = vadd.f32 %v2671, %v2684
    %v2686 = vpop.f32.mrf.mxu0
    %v2687 = vadd.f32 %v2673, %v2686
    %2688 = vdwg.mxu0
    %2689 = vmatpush.bf16.msra.mxu0 %v1728
    %2690 = vmatpush.bf16.msra.mxu0 %v1720
    %2691 = vmatpush.bf16.msra.mxu0 %v1712
    %2692 = vmatpush.bf16.msra.mxu0 %v1704
    %2693 = vmatpush.bf16.msra.mxu0 %v1696
    %2694 = vmatpush.bf16.msra.mxu0 %v1688
    %2695 = vmatpush.bf16.msra.mxu0 %v1680
    %2696 = vmatpush.bf16.msra.mxu0 %v1672
    %2697 = vmatmul.bf16.gmra.mxu0 %v127
    %v2698 = vpop.f32.mrf.mxu0
    %v2699 = vadd.f32 0.0, %v2698
    %v2700 = vpop.f32.mrf.mxu0
    %v2701 = vadd.f32 0.0, %v2700
    %2702 = vdwg.mxu0
    %2703 = vmatpush.bf16.msra.mxu0 %v1792
    %2704 = vmatpush.bf16.msra.mxu0 %v1784
    %2705 = vmatpush.bf16.msra.mxu0 %v1776
    %2706 = vmatpush.bf16.msra.mxu0 %v1768
    %2707 = vmatpush.bf16.msra.mxu0 %v1760
    %2708 = vmatpush.bf16.msra.mxu0 %v1752
    %2709 = vmatpush.bf16.msra.mxu0 %v1744
    %2710 = vmatpush.bf16.msra.mxu0 %v1736
    %2711 = vmatmul.bf16.gmra.mxu0 %v128
    %v2712 = vpop.f32.mrf.mxu0
    %v2713 = vadd.f32 %v2699, %v2712
    %v2714 = vpop.f32.mrf.mxu0
    %v2715 = vadd.f32 %v2701, %v2714
    %2716 = vdwg.mxu0
    %2717 = vmatpush.bf16.msra.mxu0 %v1856
    %2718 = vmatpush.bf16.msra.mxu0 %v1848
    %2719 = vmatpush.bf16.msra.mxu0 %v1840
    %2720 = vmatpush.bf16.msra.mxu0 %v1832
    %2721 = vmatpush.bf16.msra.mxu0 %v1824
    %2722 = vmatpush.bf16.msra.mxu0 %v1816
    %2723 = vmatpush.bf16.msra.mxu0 %v1808
    %2724 = vmatpush.bf16.msra.mxu0 %v1800
    %2725 = vmatmul.bf16.gmra.mxu0 %v129
    %v2726 = vpop.f32.mrf.mxu0
    %v2727 = vadd.f32 %v2713, %v2726
    %v2728 = vpop.f32.mrf.mxu0
    %v2729 = vadd.f32 %v2715, %v2728
    %2730 = vdwg.mxu0
    %2731 = vmatpush.bf16.msra.mxu0 %v1920
    %2732 = vmatpush.bf16.msra.mxu0 %v1912
    %2733 = vmatpush.bf16.msra.mxu0 %v1904
    %2734 = vmatpush.bf16.msra.mxu0 %v1896
    %2735 = vmatpush.bf16.msra.mxu0 %v1888
    %2736 = vmatpush.bf16.msra.mxu0 %v1880
    %2737 = vmatpush.bf16.msra.mxu0 %v1872
    %2738 = vmatpush.bf16.msra.mxu0 %v1864
    %2739 = vmatmul.bf16.gmra.mxu0 %v130
    %v2740 = vpop.f32.mrf.mxu0
    %v2741 = vadd.f32 %v2727, %v2740
    %v2742 = vpop.f32.mrf.mxu0
    %v2743 = vadd.f32 %v2729, %v2742
    %2744 = vdwg.mxu0
    %2745 = vmatpush.bf16.msra.mxu0 %v1984
    %2746 = vmatpush.bf16.msra.mxu0 %v1976
    %2747 = vmatpush.bf16.msra.mxu0 %v1968
    %2748 = vmatpush.bf16.msra.mxu0 %v1960
    %2749 = vmatpush.bf16.msra.mxu0 %v1952
    %2750 = vmatpush.bf16.msra.mxu0 %v1944
    %2751 = vmatpush.bf16.msra.mxu0 %v1936
    %2752 = vmatpush.bf16.msra.mxu0 %v1928
    %2753 = vmatmul.bf16.gmra.mxu0 %v131
    %v2754 = vpop.f32.mrf.mxu0
    %v2755 = vadd.f32 %v2741, %v2754
    %v2756 = vpop.f32.mrf.mxu0
    %v2757 = vadd.f32 %v2743, %v2756
    %2758 = vdwg.mxu0
    %2759 = vmatpush.bf16.msra.mxu0 %v2048
    %2760 = vmatpush.bf16.msra.mxu0 %v2040
    %2761 = vmatpush.bf16.msra.mxu0 %v2032
    %2762 = vmatpush.bf16.msra.mxu0 %v2024
    %2763 = vmatpush.bf16.msra.mxu0 %v2016
    %2764 = vmatpush.bf16.msra.mxu0 %v2008
    %2765 = vmatpush.bf16.msra.mxu0 %v2000
    %2766 = vmatpush.bf16.msra.mxu0 %v1992
    %2767 = vmatmul.bf16.gmra.mxu0 %v132
    %v2768 = vpop.f32.mrf.mxu0
    %v2769 = vadd.f32 %v2755, %v2768
    %v2770 = vpop.f32.mrf.mxu0
    %v2771 = vadd.f32 %v2757, %v2770
    %2772 = vdwg.mxu0
    %2773 = vmatpush.bf16.msra.mxu0 %v1729
    %2774 = vmatpush.bf16.msra.mxu0 %v1721
    %2775 = vmatpush.bf16.msra.mxu0 %v1713
    %2776 = vmatpush.bf16.msra.mxu0 %v1705
    %2777 = vmatpush.bf16.msra.mxu0 %v1697
    %2778 = vmatpush.bf16.msra.mxu0 %v1689
    %2779 = vmatpush.bf16.msra.mxu0 %v1681
    %2780 = vmatpush.bf16.msra.mxu0 %v1673
    %2781 = vmatmul.bf16.gmra.mxu0 %v127
    %v2782 = vpop.f32.mrf.mxu0
    %v2783 = vadd.f32 0.0, %v2782
    %v2784 = vpop.f32.mrf.mxu0
    %v2785 = vadd.f32 0.0, %v2784
    %2786 = vdwg.mxu0
    %2787 = vmatpush.bf16.msra.mxu0 %v1793
    %2788 = vmatpush.bf16.msra.mxu0 %v1785
    %2789 = vmatpush.bf16.msra.mxu0 %v1777
    %2790 = vmatpush.bf16.msra.mxu0 %v1769
    %2791 = vmatpush.bf16.msra.mxu0 %v1761
    %2792 = vmatpush.bf16.msra.mxu0 %v1753
    %2793 = vmatpush.bf16.msra.mxu0 %v1745
    %2794 = vmatpush.bf16.msra.mxu0 %v1737
    %2795 = vmatmul.bf16.gmra.mxu0 %v128
    %v2796 = vpop.f32.mrf.mxu0
    %v2797 = vadd.f32 %v2783, %v2796
    %v2798 = vpop.f32.mrf.mxu0
    %v2799 = vadd.f32 %v2785, %v2798
    %2800 = vdwg.mxu0
    %2801 = vmatpush.bf16.msra.mxu0 %v1857
    %2802 = vmatpush.bf16.msra.mxu0 %v1849
    %2803 = vmatpush.bf16.msra.mxu0 %v1841
    %2804 = vmatpush.bf16.msra.mxu0 %v1833
    %2805 = vmatpush.bf16.msra.mxu0 %v1825
    %2806 = vmatpush.bf16.msra.mxu0 %v1817
    %2807 = vmatpush.bf16.msra.mxu0 %v1809
    %2808 = vmatpush.bf16.msra.mxu0 %v1801
    %2809 = vmatmul.bf16.gmra.mxu0 %v129
    %v2810 = vpop.f32.mrf.mxu0
    %v2811 = vadd.f32 %v2797, %v2810
    %v2812 = vpop.f32.mrf.mxu0
    %v2813 = vadd.f32 %v2799, %v2812
    %2814 = vdwg.mxu0
    %2815 = vmatpush.bf16.msra.mxu0 %v1921
    %2816 = vmatpush.bf16.msra.mxu0 %v1913
    %2817 = vmatpush.bf16.msra.mxu0 %v1905
    %2818 = vmatpush.bf16.msra.mxu0 %v1897
    %2819 = vmatpush.bf16.msra.mxu0 %v1889
    %2820 = vmatpush.bf16.msra.mxu0 %v1881
    %2821 = vmatpush.bf16.msra.mxu0 %v1873
    %2822 = vmatpush.bf16.msra.mxu0 %v1865
    %2823 = vmatmul.bf16.gmra.mxu0 %v130
    %v2824 = vpop.f32.mrf.mxu0
    %v2825 = vadd.f32 %v2811, %v2824
    %v2826 = vpop.f32.mrf.mxu0
    %v2827 = vadd.f32 %v2813, %v2826
    %2828 = vdwg.mxu0
    %2829 = vmatpush.bf16.msra.mxu0 %v1985
    %2830 = vmatpush.bf16.msra.mxu0 %v1977
    %2831 = vmatpush.bf16.msra.mxu0 %v1969
    %2832 = vmatpush.bf16.msra.mxu0 %v1961
    %2833 = vmatpush.bf16.msra.mxu0 %v1953
    %2834 = vmatpush.bf16.msra.mxu0 %v1945
    %2835 = vmatpush.bf16.msra.mxu0 %v1937
    %2836 = vmatpush.bf16.msra.mxu0 %v1929
    %2837 = vmatmul.bf16.gmra.mxu0 %v131
    %v2838 = vpop.f32.mrf.mxu0
    %v2839 = vadd.f32 %v2825, %v2838
    %v2840 = vpop.f32.mrf.mxu0
    %v2841 = vadd.f32 %v2827, %v2840
    %2842 = vdwg.mxu0
    %2843 = vmatpush.bf16.msra.mxu0 %v2049
    %2844 = vmatpush.bf16.msra.mxu0 %v2041
    %2845 = vmatpush.bf16.msra.mxu0 %v2033
    %2846 = vmatpush.bf16.msra.mxu0 %v2025
    %2847 = vmatpush.bf16.msra.mxu0 %v2017
    %2848 = vmatpush.bf16.msra.mxu0 %v2009
    %2849 = vmatpush.bf16.msra.mxu0 %v2001
    %2850 = vmatpush.bf16.msra.mxu0 %v1993
    %2851 = vmatmul.bf16.gmra.mxu0 %v132
    %v2852 = vpop.f32.mrf.mxu0
    %v2853 = vadd.f32 %v2839, %v2852
    %v2854 = vpop.f32.mrf.mxu0
    %v2855 = vadd.f32 %v2841, %v2854
    %2856 = vdwg.mxu0
    %2857 = vmatpush.bf16.msra.mxu0 %v1730
    %2858 = vmatpush.bf16.msra.mxu0 %v1722
    %2859 = vmatpush.bf16.msra.mxu0 %v1714
    %2860 = vmatpush.bf16.msra.mxu0 %v1706
    %2861 = vmatpush.bf16.msra.mxu0 %v1698
    %2862 = vmatpush.bf16.msra.mxu0 %v1690
    %2863 = vmatpush.bf16.msra.mxu0 %v1682
    %2864 = vmatpush.bf16.msra.mxu0 %v1674
    %2865 = vmatmul.bf16.gmra.mxu0 %v127
    %v2866 = vpop.f32.mrf.mxu0
    %v2867 = vadd.f32 0.0, %v2866
    %v2868 = vpop.f32.mrf.mxu0
    %v2869 = vadd.f32 0.0, %v2868
    %2870 = vdwg.mxu0
    %2871 = vmatpush.bf16.msra.mxu0 %v1794
    %2872 = vmatpush.bf16.msra.mxu0 %v1786
    %2873 = vmatpush.bf16.msra.mxu0 %v1778
    %2874 = vmatpush.bf16.msra.mxu0 %v1770
    %2875 = vmatpush.bf16.msra.mxu0 %v1762
    %2876 = vmatpush.bf16.msra.mxu0 %v1754
    %2877 = vmatpush.bf16.msra.mxu0 %v1746
    %2878 = vmatpush.bf16.msra.mxu0 %v1738
    %2879 = vmatmul.bf16.gmra.mxu0 %v128
    %v2880 = vpop.f32.mrf.mxu0
    %v2881 = vadd.f32 %v2867, %v2880
    %v2882 = vpop.f32.mrf.mxu0
    %v2883 = vadd.f32 %v2869, %v2882
    %2884 = vdwg.mxu0
    %2885 = vmatpush.bf16.msra.mxu0 %v1858
    %2886 = vmatpush.bf16.msra.mxu0 %v1850
    %2887 = vmatpush.bf16.msra.mxu0 %v1842
    %2888 = vmatpush.bf16.msra.mxu0 %v1834
    %2889 = vmatpush.bf16.msra.mxu0 %v1826
    %2890 = vmatpush.bf16.msra.mxu0 %v1818
    %2891 = vmatpush.bf16.msra.mxu0 %v1810
    %2892 = vmatpush.bf16.msra.mxu0 %v1802
    %2893 = vmatmul.bf16.gmra.mxu0 %v129
    %v2894 = vpop.f32.mrf.mxu0
    %v2895 = vadd.f32 %v2881, %v2894
    %v2896 = vpop.f32.mrf.mxu0
    %v2897 = vadd.f32 %v2883, %v2896
    %2898 = vdwg.mxu0
    %2899 = vmatpush.bf16.msra.mxu0 %v1922
    %2900 = vmatpush.bf16.msra.mxu0 %v1914
    %2901 = vmatpush.bf16.msra.mxu0 %v1906
    %2902 = vmatpush.bf16.msra.mxu0 %v1898
    %2903 = vmatpush.bf16.msra.mxu0 %v1890
    %2904 = vmatpush.bf16.msra.mxu0 %v1882
    %2905 = vmatpush.bf16.msra.mxu0 %v1874
    %2906 = vmatpush.bf16.msra.mxu0 %v1866
    %2907 = vmatmul.bf16.gmra.mxu0 %v130
    %v2908 = vpop.f32.mrf.mxu0
    %v2909 = vadd.f32 %v2895, %v2908
    %v2910 = vpop.f32.mrf.mxu0
    %v2911 = vadd.f32 %v2897, %v2910
    %2912 = vdwg.mxu0
    %2913 = vmatpush.bf16.msra.mxu0 %v1986
    %2914 = vmatpush.bf16.msra.mxu0 %v1978
    %2915 = vmatpush.bf16.msra.mxu0 %v1970
    %2916 = vmatpush.bf16.msra.mxu0 %v1962
    %2917 = vmatpush.bf16.msra.mxu0 %v1954
    %2918 = vmatpush.bf16.msra.mxu0 %v1946
    %2919 = vmatpush.bf16.msra.mxu0 %v1938
    %2920 = vmatpush.bf16.msra.mxu0 %v1930
    %2921 = vmatmul.bf16.gmra.mxu0 %v131
    %v2922 = vpop.f32.mrf.mxu0
    %v2923 = vadd.f32 %v2909, %v2922
    %v2924 = vpop.f32.mrf.mxu0
    %v2925 = vadd.f32 %v2911, %v2924
    %2926 = vdwg.mxu0
    %2927 = vmatpush.bf16.msra.mxu0 %v2050
    %2928 = vmatpush.bf16.msra.mxu0 %v2042
    %2929 = vmatpush.bf16.msra.mxu0 %v2034
    %2930 = vmatpush.bf16.msra.mxu0 %v2026
    %2931 = vmatpush.bf16.msra.mxu0 %v2018
    %2932 = vmatpush.bf16.msra.mxu0 %v2010
    %2933 = vmatpush.bf16.msra.mxu0 %v2002
    %2934 = vmatpush.bf16.msra.mxu0 %v1994
    %2935 = vmatmul.bf16.gmra.mxu0 %v132
    %v2936 = vpop.f32.mrf.mxu0
    %v2937 = vadd.f32 %v2923, %v2936
    %v2938 = vpop.f32.mrf.mxu0
    %v2939 = vadd.f32 %v2925, %v2938
    %2940 = vdwg.mxu0
    %2941 = vmatpush.bf16.msra.mxu0 %v1731
    %2942 = vmatpush.bf16.msra.mxu0 %v1723
    %2943 = vmatpush.bf16.msra.mxu0 %v1715
    %2944 = vmatpush.bf16.msra.mxu0 %v1707
    %2945 = vmatpush.bf16.msra.mxu0 %v1699
    %2946 = vmatpush.bf16.msra.mxu0 %v1691
    %2947 = vmatpush.bf16.msra.mxu0 %v1683
    %2948 = vmatpush.bf16.msra.mxu0 %v1675
    %2949 = vmatmul.bf16.gmra.mxu0 %v127
    %v2950 = vpop.f32.mrf.mxu0
    %v2951 = vadd.f32 0.0, %v2950
    %v2952 = vpop.f32.mrf.mxu0
    %v2953 = vadd.f32 0.0, %v2952
    %2954 = vdwg.mxu0
    %2955 = vmatpush.bf16.msra.mxu0 %v1795
    %2956 = vmatpush.bf16.msra.mxu0 %v1787
    %2957 = vmatpush.bf16.msra.mxu0 %v1779
    %2958 = vmatpush.bf16.msra.mxu0 %v1771
    %2959 = vmatpush.bf16.msra.mxu0 %v1763
    %2960 = vmatpush.bf16.msra.mxu0 %v1755
    %2961 = vmatpush.bf16.msra.mxu0 %v1747
    %2962 = vmatpush.bf16.msra.mxu0 %v1739
    %2963 = vmatmul.bf16.gmra.mxu0 %v128
    %v2964 = vpop.f32.mrf.mxu0
    %v2965 = vadd.f32 %v2951, %v2964
    %v2966 = vpop.f32.mrf.mxu0
    %v2967 = vadd.f32 %v2953, %v2966
    %2968 = vdwg.mxu0
    %2969 = vmatpush.bf16.msra.mxu0 %v1859
    %2970 = vmatpush.bf16.msra.mxu0 %v1851
    %2971 = vmatpush.bf16.msra.mxu0 %v1843
    %2972 = vmatpush.bf16.msra.mxu0 %v1835
    %2973 = vmatpush.bf16.msra.mxu0 %v1827
    %2974 = vmatpush.bf16.msra.mxu0 %v1819
    %2975 = vmatpush.bf16.msra.mxu0 %v1811
    %2976 = vmatpush.bf16.msra.mxu0 %v1803
    %2977 = vmatmul.bf16.gmra.mxu0 %v129
    %v2978 = vpop.f32.mrf.mxu0
    %v2979 = vadd.f32 %v2965, %v2978
    %v2980 = vpop.f32.mrf.mxu0
    %v2981 = vadd.f32 %v2967, %v2980
    %2982 = vdwg.mxu0
    %2983 = vmatpush.bf16.msra.mxu0 %v1923
    %2984 = vmatpush.bf16.msra.mxu0 %v1915
    %2985 = vmatpush.bf16.msra.mxu0 %v1907
    %2986 = vmatpush.bf16.msra.mxu0 %v1899
    %2987 = vmatpush.bf16.msra.mxu0 %v1891
    %2988 = vmatpush.bf16.msra.mxu0 %v1883
    %2989 = vmatpush.bf16.msra.mxu0 %v1875
    %2990 = vmatpush.bf16.msra.mxu0 %v1867
    %2991 = vmatmul.bf16.gmra.mxu0 %v130
    %v2992 = vpop.f32.mrf.mxu0
    %v2993 = vadd.f32 %v2979, %v2992
    %v2994 = vpop.f32.mrf.mxu0
    %v2995 = vadd.f32 %v2981, %v2994
    %2996 = vdwg.mxu0
    %2997 = vmatpush.bf16.msra.mxu0 %v1987
    %2998 = vmatpush.bf16.msra.mxu0 %v1979
    %2999 = vmatpush.bf16.msra.mxu0 %v1971
    %3000 = vmatpush.bf16.msra.mxu0 %v1963
    %3001 = vmatpush.bf16.msra.mxu0 %v1955
    %3002 = vmatpush.bf16.msra.mxu0 %v1947
    %3003 = vmatpush.bf16.msra.mxu0 %v1939
    %3004 = vmatpush.bf16.msra.mxu0 %v1931
    %3005 = vmatmul.bf16.gmra.mxu0 %v131
    %v3006 = vpop.f32.mrf.mxu0
    %v3007 = vadd.f32 %v2993, %v3006
    %v3008 = vpop.f32.mrf.mxu0
    %v3009 = vadd.f32 %v2995, %v3008
    %3010 = vdwg.mxu0
    %3011 = vmatpush.bf16.msra.mxu0 %v2051
    %3012 = vmatpush.bf16.msra.mxu0 %v2043
    %3013 = vmatpush.bf16.msra.mxu0 %v2035
    %3014 = vmatpush.bf16.msra.mxu0 %v2027
    %3015 = vmatpush.bf16.msra.mxu0 %v2019
    %3016 = vmatpush.bf16.msra.mxu0 %v2011
    %3017 = vmatpush.bf16.msra.mxu0 %v2003
    %3018 = vmatpush.bf16.msra.mxu0 %v1995
    %3019 = vmatmul.bf16.gmra.mxu0 %v132
    %v3020 = vpop.f32.mrf.mxu0
    %v3021 = vadd.f32 %v3007, %v3020
    %v3022 = vpop.f32.mrf.mxu0
    %v3023 = vadd.f32 %v3009, %v3022
    %3024 = vdwg.mxu0
    %3025 = vmatpush.bf16.msra.mxu0 %v1732
    %3026 = vmatpush.bf16.msra.mxu0 %v1724
    %3027 = vmatpush.bf16.msra.mxu0 %v1716
    %3028 = vmatpush.bf16.msra.mxu0 %v1708
    %3029 = vmatpush.bf16.msra.mxu0 %v1700
    %3030 = vmatpush.bf16.msra.mxu0 %v1692
    %3031 = vmatpush.bf16.msra.mxu0 %v1684
    %3032 = vmatpush.bf16.msra.mxu0 %v1676
    %3033 = vmatmul.bf16.gmra.mxu0 %v127
    %v3034 = vpop.f32.mrf.mxu0
    %v3035 = vadd.f32 0.0, %v3034
    %v3036 = vpop.f32.mrf.mxu0
    %v3037 = vadd.f32 0.0, %v3036
    %3038 = vdwg.mxu0
    %3039 = vmatpush.bf16.msra.mxu0 %v1796
    %3040 = vmatpush.bf16.msra.mxu0 %v1788
    %3041 = vmatpush.bf16.msra.mxu0 %v1780
    %3042 = vmatpush.bf16.msra.mxu0 %v1772
    %3043 = vmatpush.bf16.msra.mxu0 %v1764
    %3044 = vmatpush.bf16.msra.mxu0 %v1756
    %3045 = vmatpush.bf16.msra.mxu0 %v1748
    %3046 = vmatpush.bf16.msra.mxu0 %v1740
    %3047 = vmatmul.bf16.gmra.mxu0 %v128
    %v3048 = vpop.f32.mrf.mxu0
    %v3049 = vadd.f32 %v3035, %v3048
    %v3050 = vpop.f32.mrf.mxu0
    %v3051 = vadd.f32 %v3037, %v3050
    %3052 = vdwg.mxu0
    %3053 = vmatpush.bf16.msra.mxu0 %v1860
    %3054 = vmatpush.bf16.msra.mxu0 %v1852
    %3055 = vmatpush.bf16.msra.mxu0 %v1844
    %3056 = vmatpush.bf16.msra.mxu0 %v1836
    %3057 = vmatpush.bf16.msra.mxu0 %v1828
    %3058 = vmatpush.bf16.msra.mxu0 %v1820
    %3059 = vmatpush.bf16.msra.mxu0 %v1812
    %3060 = vmatpush.bf16.msra.mxu0 %v1804
    %3061 = vmatmul.bf16.gmra.mxu0 %v129
    %v3062 = vpop.f32.mrf.mxu0
    %v3063 = vadd.f32 %v3049, %v3062
    %v3064 = vpop.f32.mrf.mxu0
    %v3065 = vadd.f32 %v3051, %v3064
    %3066 = vdwg.mxu0
    %3067 = vmatpush.bf16.msra.mxu0 %v1924
    %3068 = vmatpush.bf16.msra.mxu0 %v1916
    %3069 = vmatpush.bf16.msra.mxu0 %v1908
    %3070 = vmatpush.bf16.msra.mxu0 %v1900
    %3071 = vmatpush.bf16.msra.mxu0 %v1892
    %3072 = vmatpush.bf16.msra.mxu0 %v1884
    %3073 = vmatpush.bf16.msra.mxu0 %v1876
    %3074 = vmatpush.bf16.msra.mxu0 %v1868
    %3075 = vmatmul.bf16.gmra.mxu0 %v130
    %v3076 = vpop.f32.mrf.mxu0
    %v3077 = vadd.f32 %v3063, %v3076
    %v3078 = vpop.f32.mrf.mxu0
    %v3079 = vadd.f32 %v3065, %v3078
    %3080 = vdwg.mxu0
    %3081 = vmatpush.bf16.msra.mxu0 %v1988
    %3082 = vmatpush.bf16.msra.mxu0 %v1980
    %3083 = vmatpush.bf16.msra.mxu0 %v1972
    %3084 = vmatpush.bf16.msra.mxu0 %v1964
    %3085 = vmatpush.bf16.msra.mxu0 %v1956
    %3086 = vmatpush.bf16.msra.mxu0 %v1948
    %3087 = vmatpush.bf16.msra.mxu0 %v1940
    %3088 = vmatpush.bf16.msra.mxu0 %v1932
    %3089 = vmatmul.bf16.gmra.mxu0 %v131
    %v3090 = vpop.f32.mrf.mxu0
    %v3091 = vadd.f32 %v3077, %v3090
    %v3092 = vpop.f32.mrf.mxu0
    %v3093 = vadd.f32 %v3079, %v3092
    %3094 = vdwg.mxu0
    %3095 = vmatpush.bf16.msra.mxu0 %v2052
    %3096 = vmatpush.bf16.msra.mxu0 %v2044
    %3097 = vmatpush.bf16.msra.mxu0 %v2036
    %3098 = vmatpush.bf16.msra.mxu0 %v2028
    %3099 = vmatpush.bf16.msra.mxu0 %v2020
    %3100 = vmatpush.bf16.msra.mxu0 %v2012
    %3101 = vmatpush.bf16.msra.mxu0 %v2004
    %3102 = vmatpush.bf16.msra.mxu0 %v1996
    %3103 = vmatmul.bf16.gmra.mxu0 %v132
    %v3104 = vpop.f32.mrf.mxu0
    %v3105 = vadd.f32 %v3091, %v3104
    %v3106 = vpop.f32.mrf.mxu0
    %v3107 = vadd.f32 %v3093, %v3106
    %3108 = vdwg.mxu0
    %v3109 = vld [vmem:[#allocation5] sm:$0xff]
    %v3111 = vperm.slane %v3109, 0
    %v3112 = vperm.slane %v3109, 1
    %v3113 = vperm.slane %v3109, 2
    %v3114 = vperm.slane %v3109, 3
    %v3115 = vperm.slane %v3109, 4
    %v3116 = vperm.slane %v3109, 5
    %v3117 = vperm.slane %v3109, 6
    %v3118 = vperm.slane %v3109, 7
    %v3127 = vmul.f32 %v2517, %v3111
    %v3128 = vmul.f32 %v2601, %v3112
    %v3129 = vmul.f32 %v2685, %v3113
    %v3130 = vmul.f32 %v2769, %v3114
    %v3131 = vmul.f32 %v2853, %v3115
    %v3132 = vmul.f32 %v2937, %v3116
    %v3133 = vmul.f32 %v3021, %v3117
    %v3134 = vmul.f32 %v3105, %v3118
    %v3135 = vmul.f32 %v2519, %v3111
    %v3136 = vmul.f32 %v2603, %v3112
    %v3137 = vmul.f32 %v2687, %v3113
    %v3138 = vmul.f32 %v2771, %v3114
    %v3139 = vmul.f32 %v2855, %v3115
    %v3140 = vmul.f32 %v2939, %v3116
    %v3141 = vmul.f32 %v3023, %v3117
    %v3142 = vmul.f32 %v3107, %v3118
    %v3143 = vadd.f32 %v3127, %v3128
    %v3144 = vadd.f32 %v3143, %v3129
    %v3145 = vadd.f32 %v3144, %v3130
    %v3146 = vadd.f32 %v3145, %v3131
    %v3147 = vadd.f32 %v3146, %v3132
    %v3148 = vadd.f32 %v3147, %v3133
    %v3149 = vadd.f32 %v3148, %v3134
    %3150 = vadd.xlane.f32.xlu0 %v3149
    %v3151 = vpop.xlane.xlu0 %3150
    %v3152 = vadd.f32 %v3135, %v3136
    %v3153 = vadd.f32 %v3152, %v3137
    %v3154 = vadd.f32 %v3153, %v3138
    %v3155 = vadd.f32 %v3154, %v3139
    %v3156 = vadd.f32 %v3155, %v3140
    %v3157 = vadd.f32 %v3156, %v3141
    %v3158 = vadd.f32 %v3157, %v3142
    %3159 = vadd.xlane.f32.xlu0 %v3158
    %v3160 = vpop.xlane.xlu0 %3159
    %s3161 = sld [smem:[#allocation2]]
    %v3162 = vstv %s3161
    %v3163 = vadd.f32 %v3151, %v3162
    %v3164 = vadd.f32 %v3160, %v3162
    %v3165 = vsub.f32 0.0, %v3163
    %v3166 = vsub.f32 0.0, %v3164
    %v3167 = vmul.f32 %v3165, 1.442695
    %v3168 = vpow.pop %v3167
    %v3169 = vmul.f32 %v3166, 1.442695
    %v3170 = vpow.pop %v3169
    %v3171 = vadd.f32 %v3168, 1.0
    %v3172 = vadd.f32 %v3170, 1.0
    %v3173 = vrcp.pop %v3171
    %v3174 = vmul.f32 %v3171, %v3173
    %v3175 = vsub.f32 1.0, %v3174
    %v3176 = vmul.f32 %v3173, %v3175
    %v3177 = vadd.f32 %v3173, %v3176
    %vm3178 = vweird.f32 %v3171
    %vm3179 = vweird.f32 %v3173
    %vm3180 = vmor %vm3178, %vm3179
    %v3181 = vsel %vm3180, %v3173, %v3177
    %v3182 = vand.u32 2147483647, %v3171
    %vm3183 = vcmp.eq.f32.partialorder %v3182, 8.507059e+37
    %v3184 = vand.u32 %v3171, 2147483648
    %v3185 = vor.u32 1.1754944e-38, %v3184
    %v3186 = vsel %vm3183, %v3185, %v3181
    %v3187 = vmul.f32 1.0, %v3186
    %v3188 = vrcp.pop %v3172
    %v3189 = vmul.f32 %v3172, %v3188
    %v3190 = vsub.f32 1.0, %v3189
    %v3191 = vmul.f32 %v3188, %v3190
    %v3192 = vadd.f32 %v3188, %v3191
    %vm3193 = vweird.f32 %v3172
    %vm3194 = vweird.f32 %v3188
    %vm3195 = vmor %vm3193, %vm3194
    %v3196 = vsel %vm3195, %v3188, %v3192
    %v3197 = vand.u32 2147483647, %v3172
    %vm3198 = vcmp.eq.f32.partialorder %v3197, 8.507059e+37
    %v3199 = vand.u32 %v3172, 2147483648
    %v3200 = vor.u32 1.1754944e-38, %v3199
    %v3201 = vsel %vm3198, %v3200, %v3196
    %v3202 = vmul.f32 1.0, %v3201
    %vm3203 = vcmask 7168
    %3204 = vst.msk [vmem:[#allocation7] sm:$0xff] %vm3203, %v3187
    %3205 = vst.msk [vmem:[#allocation7 + $0x8] sm:$0xff] %vm3203, %v3202
    // Predicated region
    $region26: #{network_forward.1} parent=1 // pred_check
      _
    $region27: #{network_forward.1} parent=1 // pred_check_branch
      %3207 = sbr.rel (0) target = $region29
    $region28: #{network_forward.1} parent=1 // pred_region
      // Predicated region
      $region30: #{network_forward.1} parent=28 // pred_check
        _
      $region31: #{network_forward.1} parent=28 // pred_check_branch
        %3209 = sbr.rel (0) target = $region33
      $region32: #{network_forward.1} parent=28 // pred_region
        // Predicated region
        $region34: #{network_forward.1} parent=32 // pred_check
          _
        $region35: #{network_forward.1} parent=32 // pred_check_branch
          %3211 = sbr.rel target = $region37
        $region36: #{network_forward.1} parent=32 // pred_region
          // Predicated region
          $region49: #{network_forward.1} parent=36 // pred_check
            _
          $region50: #{network_forward.1} parent=36 // pred_check_branch
            %3227 = sbr.rel (0) target = $region52
          $region51: #{network_forward.1} parent=36 // pred_region
            %s3229 = ssub.s32 4, 1
            loop: start=0, step=1, limit=1
            $region53: #{network_forward.1} parent=51 // loop_pre_header
              _
            $region54: #{network_forward.1} parent=51 // loop_header
              %s3231 = sphi 0, %s3235
              %p3232 = scmp.ge.s32.totalorder %s3231, 1
              %s3236 = sphi [#allocation7], [#allocation7]
              %s3237 = sphi %s4, %s4
            $region55: #{network_forward.1} parent=51 // loop_header_branch
              %3234 = sbr.rel (%p3232) target = $region59
            $region56: #{network_forward.1} parent=51 // loop_body
              %v3238 = vld [vmem:[%s3236] sm:%s3229]
              %3239 = vst [vmem:[%s3237] sm:%s3229] %v3238
            $region57: #{network_forward.1} parent=51 // loop_footer
              %s3235 = sadd.s32 1, %s3231
            $region58: #{network_forward.1} parent=51 // loop_footer_branch
              %3230 = sbr.rel target = $region54
            $region59: #{network_forward.1} parent=51 // loop_exit
              _
          $region52: #{network_forward.1} parent=36 // pred_fallthru
            _
        $region37: #{network_forward.1} parent=32 // pred_fallthru
          _
        // Predicated region
        $region38: #{network_forward.1} parent=32 // pred_check
          _
        $region39: #{network_forward.1} parent=32 // pred_check_branch
          %3213 = sbr.rel (0) target = $region41
        $region40: #{network_forward.1} parent=32 // pred_region
          %s3215 = ssub.s32 4, 1
          loop: start=0, step=1, limit=1
          $region42: #{network_forward.1} parent=40 // loop_pre_header
            _
          $region43: #{network_forward.1} parent=40 // loop_header
            %s3217 = sphi 0, %s3221
            %p3218 = scmp.ge.s32.totalorder %s3217, 1
            %s3222 = sphi [#allocation7], [#allocation7]
            %s3223 = sphi %s4, %s4
          $region44: #{network_forward.1} parent=40 // loop_header_branch
            %3220 = sbr.rel (%p3218) target = $region48
          $region45: #{network_forward.1} parent=40 // loop_body
            %v3224 = vld [vmem:[%s3222] sm:%s3215]
            %3225 = vst [vmem:[%s3223] sm:%s3215] %v3224
          $region46: #{network_forward.1} parent=40 // loop_footer
            %s3221 = sadd.s32 1, %s3217
          $region47: #{network_forward.1} parent=40 // loop_footer_branch
            %3216 = sbr.rel target = $region43
          $region48: #{network_forward.1} parent=40 // loop_exit
            _
        $region41: #{network_forward.1} parent=32 // pred_fallthru
          _
      $region33: #{network_forward.1} parent=28 // pred_fallthru
        _
      %3240 = vnop
    $region29: #{network_forward.1} parent=1 // pred_fallthru
      _
    // Predicated region
    $region60: #{network_forward.1} parent=1 // pred_check
      _
    $region61: #{network_forward.1} parent=1 // pred_check_branch
      %3242 = sbr.rel (0) target = $region63
    $region62: #{network_forward.1} parent=1 // pred_region
      _
    $region63: #{network_forward.1} parent=1 // pred_fallthru
      _
    %3243 = vsyncpa [#allocation4], 1
    %3244 = vsyncpa [#allocation6], 1

</llo_original>
